<compile_context>
chip_gen: v5e
topology: v5e:2x2
jax: 0.10.0
libtpu: 0.0.40
codegen_flags: <defaults>
</compile_context>

<pallas_src>
import functools

import jax
import jax.numpy as jnp
from jax.experimental import pallas as pl
from jax.experimental.pallas import tpu as pltpu


def _mha_kernel(x_ref, wqkv_ref, wo_ref, bo_ref, o_ref, *, num_heads, head_size):
    # x block: (Bb, T, C); wqkv: (C, 3C) bf16 (scale folded into q columns);
    # wo: (C, C) bf16; bias: (1, C) f32; output block: (Bb, T, C).
    Bb, T, C = x_ref.shape
    H, hs = num_heads, head_size

    x2 = x_ref[...].astype(jnp.bfloat16).reshape(Bb * T, C)

    # Single fused QKV projection: one K=C, N=3C MXU matmul, f32 accumulation.
    qkv = jnp.dot(x2, wqkv_ref[...], preferred_element_type=jnp.float32)   # (Bb*T, 3C)
    q = qkv[:, :C]            # already scaled by C**-0.5 (folded into the weights)
    k = qkv[:, C:2 * C]
    v = qkv[:, 2 * C:]

    # Head-batched relayout (Bb*T, C) -> (H*Bb, T, hs), built only from static lane
    # slices + major-axis concatenation/reshape (no tiled-dim transpose in-kernel).
    def split_heads(a2):
        parts = [a2[:, h * hs:(h + 1) * hs].reshape(1, Bb, T, hs) for h in range(H)]
        return jnp.concatenate(parts, axis=0).reshape(H * Bb, T, hs)

    qh = split_heads(q).astype(jnp.bfloat16)
    kh = split_heads(k).astype(jnp.bfloat16)
    vh = split_heads(v).astype(jnp.bfloat16)

    # Causal mask (keep col <= row). Every row has >= 1 unmasked column, so the
    # exp/sum/reciprocal below is NaN-safe.
    row_ids = jax.lax.broadcasted_iota(jnp.int32, (T, T), 0)
    col_ids = jax.lax.broadcasted_iota(jnp.int32, (T, T), 1)
    causal = (col_ids <= row_ids)[None]                                    # (1, T, T)

    # Scores / softmax / PV for ALL heads and batch rows in single batched contractions.
    s = jnp.einsum('bqd,bkd->bqk', qh, kh,
                   preferred_element_type=jnp.float32)                     # (H*Bb, T, T)
    s = jnp.where(causal, s, -jnp.inf)
    s_max = jnp.max(s, axis=-1, keepdims=True)
    p = jnp.exp(s - s_max)
    denom = jnp.sum(p, axis=-1, keepdims=True)
    p = p * pl.reciprocal(denom, approx=True)        # EUP reciprocal instead of VPU divide

    pv = jnp.einsum('bqk,bkd->bqd', p.astype(jnp.bfloat16), vh,
                    preferred_element_type=jnp.float32)                    # (H*Bb, T, hs)

    # Merge heads back into one lane-dense (Bb*T, C) staging buffer and run the output
    # projection as a single K=C matmul (not H small K=hs matmuls), then add the bias.
    pv = pv.reshape(H, Bb * T, hs)
    att = jnp.concatenate([pv[h] for h in range(H)], axis=-1)              # (Bb*T, C)
    y = jnp.dot(att.astype(jnp.bfloat16), wo_ref[...],
                preferred_element_type=jnp.float32)                        # (Bb*T, C)
    y = y + bo_ref[...]                                                    # bias broadcast
    o_ref[...] = y.reshape(Bb, T, C).astype(o_ref.dtype)


def _pick_batch_block(B, T, C, H, x_bytes, out_bytes, act_budget):
    """Largest divisor of B whose per-step activation footprint fits `act_budget`,
    capped so the grid keeps >= 2 steps (v7x two-TC sharding + DMA/compute overlap)."""
    per_row = (
        2 * T * C * (x_bytes + out_bytes)        # double-buffered x / out pipeline blocks
        + T * (3 * C) * (4 + 4 + 2)              # qkv f32 + head-stacked f32 + bf16 copies
        + H * T * T * (4 + 4 + 2)                # f32 scores, f32 probs, bf16 probs
        + T * C * (2 + 4 + 4 + 2 + 4)            # x2 bf16, PV f32, att f32/bf16, y f32
    )
    bb = max(1, min(B, act_budget // per_row))
    if B >= 2:
        bb = min(bb, max(1, B // 2))             # keep the grid at >= 2 steps
    bb = max(1, bb)
    while B % bb:
        bb -= 1
    return bb


def multi_head_attention(x, wq, wk, wv, wo, bo, *, num_heads):
    """x: (B, T, C); wq/wk/wv/wo: (C, C) already transposed so y = x @ W; bo: (C,)."""
    B, T, C = x.shape
    head_size = C // num_heads
    assert head_size * num_heads == C

    # Fuse QKV weights (scale folded into the q columns) and cast weights to bf16:
    # halves resident weight VMEM and feeds the MXU's native bf16 path (f32 accumulate).
    scale = float(C) ** -0.5
    wqkv = jnp.concatenate([wq * scale, wk, wv], axis=1).astype(jnp.bfloat16)   # (C, 3C)
    wo_b = wo.astype(jnp.bfloat16)
    bo2 = bo.reshape(1, C).astype(jnp.float32)

    # Explicit VMEM limit (default scoped limits are small: 16 MiB v5e / 32 MiB v6e,v7x).
    try:
        vmem_cap = int(pltpu.get_tpu_info().vmem_capacity_bytes)
    except Exception:
        vmem_cap = 64 << 20                      # conservative: v7x per-core VMEM
    vmem_limit = int(min(int(vmem_cap * 0.9), 100 << 20))

    kernel = functools.partial(_mha_kernel, num_heads=num_heads, head_size=head_size)
    itemsize = x.dtype.itemsize
    cost = pl.CostEstimate(
        flops=int(8 * B * T * C * C + 4 * B * num_heads * T * T * head_size),
        transcendentals=int(B * num_heads * T * T + B * num_heads * T),
        bytes_accessed=int(2 * B * T * C * itemsize + 4 * C * C * 2 + C * 4),
    )

    def build(single_buffer_weights):
        wfactor = 1 if single_buffer_weights else 2
        weight_bytes = wfactor * (2 * (3 * C * C) + 2 * (C * C) + 4 * C)
        act_budget = vmem_limit - weight_bytes - (2 << 20)
        bb = _pick_batch_block(B, T, C, num_heads, itemsize, itemsize, act_budget)
        grid = (B // bb,)
        # Weights are grid-invariant -> request single buffering to halve their footprint.
        wkw = dict(pipeline_mode=pl.Buffered(1)) if single_buffer_weights else {}
        return pl.pallas_call(
            kernel,
            out_shape=jax.ShapeDtypeStruct((B, T, C), x.dtype),
            grid_spec=pltpu.PrefetchScalarGridSpec(
                num_scalar_prefetch=0,
                grid=grid,
                in_specs=[
                    pl.BlockSpec((bb, T, C), lambda b: (b, 0, 0)),             # x
                    pl.BlockSpec((C, 3 * C), lambda b: (0, 0), **wkw),         # fused wqkv
                    pl.BlockSpec((C, C), lambda b: (0, 0), **wkw),             # wo (proj)
                    pl.BlockSpec((1, C), lambda b: (0, 0), **wkw),             # proj bias
                ],
                out_specs=pl.BlockSpec((bb, T, C), lambda b: (b, 0, 0)),
            ),
            compiler_params=pltpu.CompilerParams(
                dimension_semantics=("parallel",),
                vmem_limit_bytes=vmem_limit,
            ),
            cost_estimate=cost,
        )

    try:
        return build(single_buffer_weights=True)(x, wqkv, wo_b, bo2)
    except Exception:
        # TODO(synk): pl.Buffered(1) single-buffered weight blocks not supported on this
        # jax/libtpu combination; fall back to default double-buffered weight blocks.
        return build(single_buffer_weights=False)(x, wqkv, wo_b, bo2)


def _reference(x, wq, wk, wv, wo, bo, *, num_heads):
    """Pure-JAX f32 reference mirroring the PyTorch forward (eval mode)."""
    B, T, C = x.shape
    hs = C // num_heads
    q = x @ wq
    k = x @ wk
    v = x @ wv
    scale = float(C) ** -0.5
    mask = jnp.tril(jnp.ones((T, T), dtype=bool))
    outs = []
    for h in range(num_heads):
        qh, kh, vh = (a[..., h * hs:(h + 1) * hs] for a in (q, k, v))
        s = jnp.einsum("btd,bsd->bts", qh, kh) * scale
        s = jnp.where(mask[None], s, -jnp.inf)
        p = jax.nn.softmax(s, axis=-1)
        outs.append(jnp.einsum("bts,bsd->btd", p, vh))
    out = jnp.concatenate(outs, axis=-1)
    return out @ wo + bo


if __name__ == "__main__":
    # Small config consistent with the module: n_embd=32, num_heads=4 (head_size=8),
    # block_size >= T, batch=2, T=8.
    B, T, C = 2, 8, 32
    num_heads = 4

    key = jax.random.PRNGKey(0)
    kx, kq, kk, kv, kwo, kbo = jax.random.split(key, 6)

    x = jax.random.normal(kx, (B, T, C), dtype=jnp.float32)

    # PyTorch-style uniform(-1/sqrt(fan_in), 1/sqrt(fan_in)) init, deterministic.
    bound = 1.0 / (C ** 0.5)

    def init(k_, shape):
        return jax.random.uniform(k_, shape, jnp.float32, -bound, bound)

    # Stored already transposed: kernel computes y = x @ W, i.e. W = W_torch.T
    wq = init(kq, (C, C))
    wk = init(kk, (C, C))
    wv = init(kv, (C, C))
    wo = init(kwo, (C, C))
    bo = init(kbo, (C,))

    y = multi_head_attention(x, wq, wk, wv, wo, bo, num_heads=num_heads)
    y = jax.block_until_ready(y)

    y_ref = _reference(x, wq, wk, wv, wo, bo, num_heads=num_heads)
    # bf16 MXU operands + approx reciprocal -> compare against the f32 reference
    # with a bf16-appropriate tolerance.
    assert jnp.allclose(y, y_ref, atol=3e-2, rtol=3e-2), "mismatch vs reference"

    print("KERNEL_OK")
</pallas_src>

<mosaic_0001>
module attributes {stable_mosaic.version = 11 : i64} {
  func.func @_mha_kernel(%arg0: i32, %arg1: memref<1x8x32xf32, #tpu.memory_space<vmem>>, %arg2: memref<32x96xbf16, #tpu.memory_space<vmem>>, %arg3: memref<32x32xbf16, #tpu.memory_space<vmem>>, %arg4: memref<1x32xf32, #tpu.memory_space<vmem>>, %arg5: memref<1x8x32xf32, #tpu.memory_space<vmem>>) attributes {dimension_semantics = [#tpu.dimension_semantics<parallel>], iteration_bounds = array<i64: 2>, scalar_prefetch = 0 : i64, scratch_operands = 0 : i64, tpu.core_type = #tpu.core_type<tc>, window_params = [{transform_indices = @transform_0, window_bounds = array<i64: 1, 8, 32>}, {pipeline_mode = #tpu.pipeline_mode<synchronous>, transform_indices = @transform_1, window_bounds = array<i64: 32, 96>}, {pipeline_mode = #tpu.pipeline_mode<synchronous>, transform_indices = @transform_2, window_bounds = array<i64: 32, 32>}, {pipeline_mode = #tpu.pipeline_mode<synchronous>, transform_indices = @transform_3, window_bounds = array<i64: 1, 32>}, {transform_indices = @transform_4, window_bounds = array<i64: 1, 8, 32>}]} {
    %c0 = arith.constant 0 : index
    %c0_0 = arith.constant 0 : index
    %c0_1 = arith.constant 0 : index
    %0 = vector.load %arg1[%c0, %c0_0, %c0_1] : memref<1x8x32xf32, #tpu.memory_space<vmem>>, vector<1x8x32xf32>
    %1 = arith.truncf %0 : vector<1x8x32xf32> to vector<1x8x32xbf16>
    %2 = vector.shape_cast %1 : vector<1x8x32xbf16> to vector<8x32xbf16>
    %c0_2 = arith.constant 0 : index
    %c0_3 = arith.constant 0 : index
    %3 = vector.load %arg2[%c0_2, %c0_3] : memref<32x96xbf16, #tpu.memory_space<vmem>>, vector<32x96xbf16>
    %cst = arith.constant dense<0.000000e+00> : vector<8x96xf32>
    %4 = tpu.matmul %2, %3, %cst {dimension_numbers = #tpu.dot_dimension_numbers<[1], [0], [0], [1], [0, 0, 1, 1], [], []>} : vector<8x32xbf16>, vector<32x96xbf16>, vector<8x96xf32> -> vector<8x96xf32>
    %5 = vector.extract_strided_slice %4 {offsets = [0, 0], sizes = [8, 32], strides = [1, 1]} : vector<8x96xf32> to vector<8x32xf32>
    %6 = vector.extract_strided_slice %4 {offsets = [0, 32], sizes = [8, 32], strides = [1, 1]} : vector<8x96xf32> to vector<8x32xf32>
    %7 = vector.extract_strided_slice %4 {offsets = [0, 64], sizes = [8, 32], strides = [1, 1]} : vector<8x96xf32> to vector<8x32xf32>
    %8 = vector.extract_strided_slice %5 {offsets = [0, 0], sizes = [8, 8], strides = [1, 1]} : vector<8x32xf32> to vector<8x8xf32>
    %9 = vector.shape_cast %8 : vector<8x8xf32> to vector<1x1x8x8xf32>
    %10 = vector.extract_strided_slice %5 {offsets = [0, 8], sizes = [8, 8], strides = [1, 1]} : vector<8x32xf32> to vector<8x8xf32>
    %11 = vector.shape_cast %10 : vector<8x8xf32> to vector<1x1x8x8xf32>
    %12 = vector.extract_strided_slice %5 {offsets = [0, 16], sizes = [8, 8], strides = [1, 1]} : vector<8x32xf32> to vector<8x8xf32>
    %13 = vector.shape_cast %12 : vector<8x8xf32> to vector<1x1x8x8xf32>
    %14 = vector.extract_strided_slice %5 {offsets = [0, 24], sizes = [8, 8], strides = [1, 1]} : vector<8x32xf32> to vector<8x8xf32>
    %15 = vector.shape_cast %14 : vector<8x8xf32> to vector<1x1x8x8xf32>
    %16 = tpu.concatenate %9, %11, %13, %15 in 0 : vector<1x1x8x8xf32>, vector<1x1x8x8xf32>, vector<1x1x8x8xf32>, vector<1x1x8x8xf32> -> vector<4x1x8x8xf32>
    %17 = vector.shape_cast %16 : vector<4x1x8x8xf32> to vector<4x8x8xf32>
    %18 = arith.truncf %17 : vector<4x8x8xf32> to vector<4x8x8xbf16>
    %19 = vector.extract_strided_slice %6 {offsets = [0, 0], sizes = [8, 8], strides = [1, 1]} : vector<8x32xf32> to vector<8x8xf32>
    %20 = vector.shape_cast %19 : vector<8x8xf32> to vector<1x1x8x8xf32>
    %21 = vector.extract_strided_slice %6 {offsets = [0, 8], sizes = [8, 8], strides = [1, 1]} : vector<8x32xf32> to vector<8x8xf32>
    %22 = vector.shape_cast %21 : vector<8x8xf32> to vector<1x1x8x8xf32>
    %23 = vector.extract_strided_slice %6 {offsets = [0, 16], sizes = [8, 8], strides = [1, 1]} : vector<8x32xf32> to vector<8x8xf32>
    %24 = vector.shape_cast %23 : vector<8x8xf32> to vector<1x1x8x8xf32>
    %25 = vector.extract_strided_slice %6 {offsets = [0, 24], sizes = [8, 8], strides = [1, 1]} : vector<8x32xf32> to vector<8x8xf32>
    %26 = vector.shape_cast %25 : vector<8x8xf32> to vector<1x1x8x8xf32>
    %27 = tpu.concatenate %20, %22, %24, %26 in 0 : vector<1x1x8x8xf32>, vector<1x1x8x8xf32>, vector<1x1x8x8xf32>, vector<1x1x8x8xf32> -> vector<4x1x8x8xf32>
    %28 = vector.shape_cast %27 : vector<4x1x8x8xf32> to vector<4x8x8xf32>
    %29 = arith.truncf %28 : vector<4x8x8xf32> to vector<4x8x8xbf16>
    %30 = vector.extract_strided_slice %7 {offsets = [0, 0], sizes = [8, 8], strides = [1, 1]} : vector<8x32xf32> to vector<8x8xf32>
    %31 = vector.shape_cast %30 : vector<8x8xf32> to vector<1x1x8x8xf32>
    %32 = vector.extract_strided_slice %7 {offsets = [0, 8], sizes = [8, 8], strides = [1, 1]} : vector<8x32xf32> to vector<8x8xf32>
    %33 = vector.shape_cast %32 : vector<8x8xf32> to vector<1x1x8x8xf32>
    %34 = vector.extract_strided_slice %7 {offsets = [0, 16], sizes = [8, 8], strides = [1, 1]} : vector<8x32xf32> to vector<8x8xf32>
    %35 = vector.shape_cast %34 : vector<8x8xf32> to vector<1x1x8x8xf32>
    %36 = vector.extract_strided_slice %7 {offsets = [0, 24], sizes = [8, 8], strides = [1, 1]} : vector<8x32xf32> to vector<8x8xf32>
    %37 = vector.shape_cast %36 : vector<8x8xf32> to vector<1x1x8x8xf32>
    %38 = tpu.concatenate %31, %33, %35, %37 in 0 : vector<1x1x8x8xf32>, vector<1x1x8x8xf32>, vector<1x1x8x8xf32>, vector<1x1x8x8xf32> -> vector<4x1x8x8xf32>
    %39 = vector.shape_cast %38 : vector<4x1x8x8xf32> to vector<4x8x8xf32>
    %40 = arith.truncf %39 : vector<4x8x8xf32> to vector<4x8x8xbf16>
    %41 = tpu.iota {dimensions = array<i32: 0>} : vector<8x8xi32>
    %42 = tpu.iota {dimensions = array<i32: 1>} : vector<8x8xi32>
    %43 = arith.cmpi sle, %42, %41 : vector<8x8xi32>
    %44 = vector.shape_cast %43 : vector<8x8xi1> to vector<1x8x8xi1>
    "tpu.trace_start"() <{level = 10 : i32, message = "bqd,bkd->bqk"}> : () -> ()
    %cst_4 = arith.constant dense<0.000000e+00> : vector<4x8x8xf32>
    %45 = tpu.matmul %18, %29, %cst_4 {dimension_numbers = #tpu.dot_dimension_numbers<[2], [2], [1], [1], [0, 0, 0, 1, 1, 1], [0], [0]>} : vector<4x8x8xbf16>, vector<4x8x8xbf16>, vector<4x8x8xf32> -> vector<4x8x8xf32>
    %cst_5 = arith.constant 0xFF800000 : f32
    "tpu.trace_stop"() : () -> ()
    %46 = vector.shape_cast %44 : vector<1x8x8xi1> to vector<1x8x8xi1>
    %47 = vector.broadcast %46 : vector<1x8x8xi1> to vector<4x8x8xi1>
    %48 = vector.broadcast %cst_5 : f32 to vector<4x8x8xf32>
    %49 = arith.select %47, %45, %48 : vector<4x8x8xi1>, vector<4x8x8xf32>
    %cst_6 = arith.constant dense<0xFF800000> : vector<4x8xf32>
    %50 = vector.multi_reduction <maximumf>, %49, %cst_6 [2] : vector<4x8x8xf32> to vector<4x8xf32>
    %51 = vector.shape_cast %50 : vector<4x8xf32> to vector<4x8x1xf32>
    %52 = vector.broadcast %51 : vector<4x8x1xf32> to vector<4x8x8xf32>
    %53 = arith.subf %49, %52 : vector<4x8x8xf32>
    %54 = math.exp %53 : vector<4x8x8xf32>
    %cst_7 = arith.constant dense<0.000000e+00> : vector<4x8xf32>
    %55 = vector.multi_reduction <add>, %54, %cst_7 [2] : vector<4x8x8xf32> to vector<4x8xf32>
    %56 = vector.shape_cast %55 : vector<4x8xf32> to vector<4x8x1xf32>
    %57 = tpu.reciprocal %56 {approx = true} : vector<4x8x1xf32> -> vector<4x8x1xf32>
    %58 = vector.broadcast %57 : vector<4x8x1xf32> to vector<4x8x8xf32>
    %59 = arith.mulf %54, %58 : vector<4x8x8xf32>
    %60 = arith.truncf %59 : vector<4x8x8xf32> to vector<4x8x8xbf16>
    "tpu.trace_start"() <{level = 10 : i32, message = "bqk,bkd->bqd"}> : () -> ()
    %cst_8 = arith.constant dense<0.000000e+00> : vector<4x8x8xf32>
    %61 = tpu.matmul %60, %40, %cst_8 {dimension_numbers = #tpu.dot_dimension_numbers<[2], [1], [1], [2], [0, 0, 0, 1, 1, 2], [0], [0]>} : vector<4x8x8xbf16>, vector<4x8x8xbf16>, vector<4x8x8xf32> -> vector<4x8x8xf32>
    "tpu.trace_stop"() : () -> ()
    %62 = vector.extract_strided_slice %61 {offsets = [0, 0, 0], sizes = [1, 8, 8], strides = [1, 1, 1]} : vector<4x8x8xf32> to vector<1x8x8xf32>
    %63 = vector.shape_cast %62 : vector<1x8x8xf32> to vector<8x8xf32>
    %64 = vector.extract_strided_slice %61 {offsets = [1, 0, 0], sizes = [1, 8, 8], strides = [1, 1, 1]} : vector<4x8x8xf32> to vector<1x8x8xf32>
    %65 = vector.shape_cast %64 : vector<1x8x8xf32> to vector<8x8xf32>
    %66 = vector.extract_strided_slice %61 {offsets = [2, 0, 0], sizes = [1, 8, 8], strides = [1, 1, 1]} : vector<4x8x8xf32> to vector<1x8x8xf32>
    %67 = vector.shape_cast %66 : vector<1x8x8xf32> to vector<8x8xf32>
    %68 = vector.extract_strided_slice %61 {offsets = [3, 0, 0], sizes = [1, 8, 8], strides = [1, 1, 1]} : vector<4x8x8xf32> to vector<1x8x8xf32>
    %69 = vector.shape_cast %68 : vector<1x8x8xf32> to vector<8x8xf32>
    %70 = tpu.concatenate %63, %65, %67, %69 in 1 : vector<8x8xf32>, vector<8x8xf32>, vector<8x8xf32>, vector<8x8xf32> -> vector<8x32xf32>
    %71 = arith.truncf %70 : vector<8x32xf32> to vector<8x32xbf16>
    %c0_9 = arith.constant 0 : index
    %c0_10 = arith.constant 0 : index
    %72 = vector.load %arg3[%c0_9, %c0_10] : memref<32x32xbf16, #tpu.memory_space<vmem>>, vector<32x32xbf16>
    %cst_11 = arith.constant dense<0.000000e+00> : vector<8x32xf32>
    %73 = tpu.matmul %71, %72, %cst_11 {dimension_numbers = #tpu.dot_dimension_numbers<[1], [0], [0], [1], [0, 0, 1, 1], [], []>} : vector<8x32xbf16>, vector<32x32xbf16>, vector<8x32xf32> -> vector<8x32xf32>
    %c0_12 = arith.constant 0 : index
    %c0_13 = arith.constant 0 : index
    %74 = vector.load %arg4[%c0_12, %c0_13] : memref<1x32xf32, #tpu.memory_space<vmem>>, vector<1x32xf32>
    %75 = vector.broadcast %74 : vector<1x32xf32> to vector<8x32xf32>
    %76 = arith.addf %73, %75 : vector<8x32xf32>
    %77 = vector.shape_cast %76 : vector<8x32xf32> to vector<1x8x32xf32>
    %c0_14 = arith.constant 0 : index
    %c0_15 = arith.constant 0 : index
    %c0_16 = arith.constant 0 : index
    %78 = vector.load %arg5[%c0_14, %c0_15, %c0_16] : memref<1x8x32xf32, #tpu.memory_space<vmem>>, vector<1x8x32xf32>
    tpu.vector_store %arg5[%c0_14, %c0_15, %c0_16], %77 {strides = array<i32>} : memref<1x8x32xf32, #tpu.memory_space<vmem>>, vector<1x8x32xf32>,
    return
  }
  func.func @transform_0(%arg0: i32) -> (i32, i32, i32) {
    %c0_i32 = arith.constant 0 : i32
    %c0_i32_0 = arith.constant 0 : i32
    %c0_i32_1 = arith.constant 0 : i32
    return %arg0, %c0_i32, %c0_i32_0 : i32, i32, i32
  }
  func.func @transform_1(%arg0: i32) -> (i32, i32) {
    %c0_i32 = arith.constant 0 : i32
    %c0_i32_0 = arith.constant 0 : i32
    %c0_i32_1 = arith.constant 0 : i32
    return %c0_i32, %c0_i32_0 : i32, i32
  }
  func.func @transform_2(%arg0: i32) -> (i32, i32) {
    %c0_i32 = arith.constant 0 : i32
    %c0_i32_0 = arith.constant 0 : i32
    %c0_i32_1 = arith.constant 0 : i32
    return %c0_i32, %c0_i32_0 : i32, i32
  }
  func.func @transform_3(%arg0: i32) -> (i32, i32) {
    %c0_i32 = arith.constant 0 : i32
    %c0_i32_0 = arith.constant 0 : i32
    %c0_i32_1 = arith.constant 0 : i32
    return %c0_i32, %c0_i32_0 : i32, i32
  }
  func.func @transform_4(%arg0: i32) -> (i32, i32, i32) {
    %c0_i32 = arith.constant 0 : i32
    %c0_i32_0 = arith.constant 0 : i32
    %c0_i32_1 = arith.constant 0 : i32
    return %arg0, %c0_i32, %c0_i32_0 : i32, i32, i32
  }
}

module attributes {stable_mosaic.version = 11 : i64} {
  func.func @_mha_kernel(%arg0: i32, %arg1: memref<1x8x32xf32, #tpu.memory_space<vmem>>, %arg2: memref<32x96xbf16, #tpu.memory_space<vmem>>, %arg3: memref<32x32xbf16, #tpu.memory_space<vmem>>, %arg4: memref<1x32xf32, #tpu.memory_space<vmem>>, %arg5: memref<1x8x32xf32, #tpu.memory_space<vmem>>) attributes {dimension_semantics = [#tpu.dimension_semantics<parallel>], iteration_bounds = array<i64: 2>, scalar_prefetch = 0 : i64, scratch_operands = 0 : i64, tpu.core_type = #tpu.core_type<tc>, window_params = [{transform_indices = @transform_0, window_bounds = array<i64: 1, 8, 32>}, {pipeline_mode = #tpu.pipeline_mode<synchronous>, transform_indices = @transform_1, window_bounds = array<i64: 32, 96>}, {pipeline_mode = #tpu.pipeline_mode<synchronous>, transform_indices = @transform_2, window_bounds = array<i64: 32, 32>}, {pipeline_mode = #tpu.pipeline_mode<synchronous>, transform_indices = @transform_3, window_bounds = array<i64: 1, 32>}, {transform_indices = @transform_4, window_bounds = array<i64: 1, 8, 32>}]} {
    %c0 = arith.constant 0 : index
    %c0_0 = arith.constant 0 : index
    %c0_1 = arith.constant 0 : index
    %0 = vector.load %arg1[%c0, %c0_0, %c0_1] : memref<1x8x32xf32, #tpu.memory_space<vmem>>, vector<1x8x32xf32>
    %1 = arith.truncf %0 : vector<1x8x32xf32> to vector<1x8x32xbf16>
    %2 = vector.shape_cast %1 : vector<1x8x32xbf16> to vector<8x32xbf16>
    %c0_2 = arith.constant 0 : index
    %c0_3 = arith.constant 0 : index
    %3 = vector.load %arg2[%c0_2, %c0_3] : memref<32x96xbf16, #tpu.memory_space<vmem>>, vector<32x96xbf16>
    %cst = arith.constant dense<0.000000e+00> : vector<8x96xf32>
    %4 = tpu.matmul %2, %3, %cst {dimension_numbers = #tpu.dot_dimension_numbers<[1], [0], [0], [1], [0, 0, 1, 1], [], []>} : vector<8x32xbf16>, vector<32x96xbf16>, vector<8x96xf32> -> vector<8x96xf32>
    %5 = vector.extract_strided_slice %4 {offsets = [0, 0], sizes = [8, 32], strides = [1, 1]} : vector<8x96xf32> to vector<8x32xf32>
    %6 = vector.extract_strided_slice %4 {offsets = [0, 32], sizes = [8, 32], strides = [1, 1]} : vector<8x96xf32> to vector<8x32xf32>
    %7 = vector.extract_strided_slice %4 {offsets = [0, 64], sizes = [8, 32], strides = [1, 1]} : vector<8x96xf32> to vector<8x32xf32>
    %8 = vector.extract_strided_slice %5 {offsets = [0, 0], sizes = [8, 8], strides = [1, 1]} : vector<8x32xf32> to vector<8x8xf32>
    %9 = vector.shape_cast %8 : vector<8x8xf32> to vector<1x1x8x8xf32>
    %10 = vector.extract_strided_slice %5 {offsets = [0, 8], sizes = [8, 8], strides = [1, 1]} : vector<8x32xf32> to vector<8x8xf32>
    %11 = vector.shape_cast %10 : vector<8x8xf32> to vector<1x1x8x8xf32>
    %12 = vector.extract_strided_slice %5 {offsets = [0, 16], sizes = [8, 8], strides = [1, 1]} : vector<8x32xf32> to vector<8x8xf32>
    %13 = vector.shape_cast %12 : vector<8x8xf32> to vector<1x1x8x8xf32>
    %14 = vector.extract_strided_slice %5 {offsets = [0, 24], sizes = [8, 8], strides = [1, 1]} : vector<8x32xf32> to vector<8x8xf32>
    %15 = vector.shape_cast %14 : vector<8x8xf32> to vector<1x1x8x8xf32>
    %16 = tpu.concatenate %9, %11, %13, %15 in 0 : vector<1x1x8x8xf32>, vector<1x1x8x8xf32>, vector<1x1x8x8xf32>, vector<1x1x8x8xf32> -> vector<4x1x8x8xf32>
    %17 = vector.shape_cast %16 : vector<4x1x8x8xf32> to vector<4x8x8xf32>
    %18 = arith.truncf %17 : vector<4x8x8xf32> to vector<4x8x8xbf16>
    %19 = vector.extract_strided_slice %6 {offsets = [0, 0], sizes = [8, 8], strides = [1, 1]} : vector<8x32xf32> to vector<8x8xf32>
    %20 = vector.shape_cast %19 : vector<8x8xf32> to vector<1x1x8x8xf32>
    %21 = vector.extract_strided_slice %6 {offsets = [0, 8], sizes = [8, 8], strides = [1, 1]} : vector<8x32xf32> to vector<8x8xf32>
    %22 = vector.shape_cast %21 : vector<8x8xf32> to vector<1x1x8x8xf32>
    %23 = vector.extract_strided_slice %6 {offsets = [0, 16], sizes = [8, 8], strides = [1, 1]} : vector<8x32xf32> to vector<8x8xf32>
    %24 = vector.shape_cast %23 : vector<8x8xf32> to vector<1x1x8x8xf32>
    %25 = vector.extract_strided_slice %6 {offsets = [0, 24], sizes = [8, 8], strides = [1, 1]} : vector<8x32xf32> to vector<8x8xf32>
    %26 = vector.shape_cast %25 : vector<8x8xf32> to vector<1x1x8x8xf32>
    %27 = tpu.concatenate %20, %22, %24, %26 in 0 : vector<1x1x8x8xf32>, vector<1x1x8x8xf32>, vector<1x1x8x8xf32>, vector<1x1x8x8xf32> -> vector<4x1x8x8xf32>
    %28 = vector.shape_cast %27 : vector<4x1x8x8xf32> to vector<4x8x8xf32>
    %29 = arith.truncf %28 : vector<4x8x8xf32> to vector<4x8x8xbf16>
    %30 = vector.extract_strided_slice %7 {offsets = [0, 0], sizes = [8, 8], strides = [1, 1]} : vector<8x32xf32> to vector<8x8xf32>
    %31 = vector.shape_cast %30 : vector<8x8xf32> to vector<1x1x8x8xf32>
    %32 = vector.extract_strided_slice %7 {offsets = [0, 8], sizes = [8, 8], strides = [1, 1]} : vector<8x32xf32> to vector<8x8xf32>
    %33 = vector.shape_cast %32 : vector<8x8xf32> to vector<1x1x8x8xf32>
    %34 = vector.extract_strided_slice %7 {offsets = [0, 16], sizes = [8, 8], strides = [1, 1]} : vector<8x32xf32> to vector<8x8xf32>
    %35 = vector.shape_cast %34 : vector<8x8xf32> to vector<1x1x8x8xf32>
    %36 = vector.extract_strided_slice %7 {offsets = [0, 24], sizes = [8, 8], strides = [1, 1]} : vector<8x32xf32> to vector<8x8xf32>
    %37 = vector.shape_cast %36 : vector<8x8xf32> to vector<1x1x8x8xf32>
    %38 = tpu.concatenate %31, %33, %35, %37 in 0 : vector<1x1x8x8xf32>, vector<1x1x8x8xf32>, vector<1x1x8x8xf32>, vector<1x1x8x8xf32> -> vector<4x1x8x8xf32>
    %39 = vector.shape_cast %38 : vector<4x1x8x8xf32> to vector<4x8x8xf32>
    %40 = arith.truncf %39 : vector<4x8x8xf32> to vector<4x8x8xbf16>
    %41 = tpu.iota {dimensions = array<i32: 0>} : vector<8x8xi32>
    %42 = tpu.iota {dimensions = array<i32: 1>} : vector<8x8xi32>
    %43 = arith.cmpi sle, %42, %41 : vector<8x8xi32>
    %44 = vector.shape_cast %43 : vector<8x8xi1> to vector<1x8x8xi1>
    "tpu.trace_start"() <{level = 10 : i32, message = "bqd,bkd->bqk"}> : () -> ()
    %cst_4 = arith.constant dense<0.000000e+00> : vector<4x8x8xf32>
    %45 = tpu.matmul %18, %29, %cst_4 {dimension_numbers = #tpu.dot_dimension_numbers<[2], [2], [1], [1], [0, 0, 0, 1, 1, 1], [0], [0]>} : vector<4x8x8xbf16>, vector<4x8x8xbf16>, vector<4x8x8xf32> -> vector<4x8x8xf32>
    %cst_5 = arith.constant 0xFF800000 : f32
    "tpu.trace_stop"() : () -> ()
    %46 = vector.shape_cast %44 : vector<1x8x8xi1> to vector<1x8x8xi1>
    %47 = vector.broadcast %46 : vector<1x8x8xi1> to vector<4x8x8xi1>
    %48 = vector.broadcast %cst_5 : f32 to vector<4x8x8xf32>
    %49 = arith.select %47, %45, %48 : vector<4x8x8xi1>, vector<4x8x8xf32>
    %cst_6 = arith.constant dense<0xFF800000> : vector<4x8xf32>
    %50 = vector.multi_reduction <maximumf>, %49, %cst_6 [2] : vector<4x8x8xf32> to vector<4x8xf32>
    %51 = vector.shape_cast %50 : vector<4x8xf32> to vector<4x8x1xf32>
    %52 = vector.broadcast %51 : vector<4x8x1xf32> to vector<4x8x8xf32>
    %53 = arith.subf %49, %52 : vector<4x8x8xf32>
    %54 = math.exp %53 : vector<4x8x8xf32>
    %cst_7 = arith.constant dense<0.000000e+00> : vector<4x8xf32>
    %55 = vector.multi_reduction <add>, %54, %cst_7 [2] : vector<4x8x8xf32> to vector<4x8xf32>
    %56 = vector.shape_cast %55 : vector<4x8xf32> to vector<4x8x1xf32>
    %57 = tpu.reciprocal %56 {approx = true} : vector<4x8x1xf32> -> vector<4x8x1xf32>
    %58 = vector.broadcast %57 : vector<4x8x1xf32> to vector<4x8x8xf32>
    %59 = arith.mulf %54, %58 : vector<4x8x8xf32>
    %60 = arith.truncf %59 : vector<4x8x8xf32> to vector<4x8x8xbf16>
    "tpu.trace_start"() <{level = 10 : i32, message = "bqk,bkd->bqd"}> : () -> ()
    %cst_8 = arith.constant dense<0.000000e+00> : vector<4x8x8xf32>
    %61 = tpu.matmul %60, %40, %cst_8 {dimension_numbers = #tpu.dot_dimension_numbers<[2], [1], [1], [2], [0, 0, 0, 1, 1, 2], [0], [0]>} : vector<4x8x8xbf16>, vector<4x8x8xbf16>, vector<4x8x8xf32> -> vector<4x8x8xf32>
    "tpu.trace_stop"() : () -> ()
    %62 = vector.extract_strided_slice %61 {offsets = [0, 0, 0], sizes = [1, 8, 8], strides = [1, 1, 1]} : vector<4x8x8xf32> to vector<1x8x8xf32>
    %63 = vector.shape_cast %62 : vector<1x8x8xf32> to vector<8x8xf32>
    %64 = vector.extract_strided_slice %61 {offsets = [1, 0, 0], sizes = [1, 8, 8], strides = [1, 1, 1]} : vector<4x8x8xf32> to vector<1x8x8xf32>
    %65 = vector.shape_cast %64 : vector<1x8x8xf32> to vector<8x8xf32>
    %66 = vector.extract_strided_slice %61 {offsets = [2, 0, 0], sizes = [1, 8, 8], strides = [1, 1, 1]} : vector<4x8x8xf32> to vector<1x8x8xf32>
    %67 = vector.shape_cast %66 : vector<1x8x8xf32> to vector<8x8xf32>
    %68 = vector.extract_strided_slice %61 {offsets = [3, 0, 0], sizes = [1, 8, 8], strides = [1, 1, 1]} : vector<4x8x8xf32> to vector<1x8x8xf32>
    %69 = vector.shape_cast %68 : vector<1x8x8xf32> to vector<8x8xf32>
    %70 = tpu.concatenate %63, %65, %67, %69 in 1 : vector<8x8xf32>, vector<8x8xf32>, vector<8x8xf32>, vector<8x8xf32> -> vector<8x32xf32>
    %71 = arith.truncf %70 : vector<8x32xf32> to vector<8x32xbf16>
    %c0_9 = arith.constant 0 : index
    %c0_10 = arith.constant 0 : index
    %72 = vector.load %arg3[%c0_9, %c0_10] : memref<32x32xbf16, #tpu.memory_space<vmem>>, vector<32x32xbf16>
    %cst_11 = arith.constant dense<0.000000e+00> : vector<8x32xf32>
    %73 = tpu.matmul %71, %72, %cst_11 {dimension_numbers = #tpu.dot_dimension_numbers<[1], [0], [0], [1], [0, 0, 1, 1], [], []>} : vector<8x32xbf16>, vector<32x32xbf16>, vector<8x32xf32> -> vector<8x32xf32>
    %c0_12 = arith.constant 0 : index
    %c0_13 = arith.constant 0 : index
    %74 = vector.load %arg4[%c0_12, %c0_13] : memref<1x32xf32, #tpu.memory_space<vmem>>, vector<1x32xf32>
    %75 = vector.broadcast %74 : vector<1x32xf32> to vector<8x32xf32>
    %76 = arith.addf %73, %75 : vector<8x32xf32>
    %77 = vector.shape_cast %76 : vector<8x32xf32> to vector<1x8x32xf32>
    %c0_14 = arith.constant 0 : index
    %c0_15 = arith.constant 0 : index
    %c0_16 = arith.constant 0 : index
    %78 = vector.load %arg5[%c0_14, %c0_15, %c0_16] : memref<1x8x32xf32, #tpu.memory_space<vmem>>, vector<1x8x32xf32>
    tpu.vector_store %arg5[%c0_14, %c0_15, %c0_16], %77 {strides = array<i32>} : memref<1x8x32xf32, #tpu.memory_space<vmem>>, vector<1x8x32xf32>,
    return
  }
  func.func @transform_0(%arg0: i32) -> (i32, i32, i32) {
    %c0_i32 = arith.constant 0 : i32
    %c0_i32_0 = arith.constant 0 : i32
    %c0_i32_1 = arith.constant 0 : i32
    return %arg0, %c0_i32, %c0_i32_0 : i32, i32, i32
  }
  func.func @transform_1(%arg0: i32) -> (i32, i32) {
    %c0_i32 = arith.constant 0 : i32
    %c0_i32_0 = arith.constant 0 : i32
    %c0_i32_1 = arith.constant 0 : i32
    return %c0_i32, %c0_i32_0 : i32, i32
  }
  func.func @transform_2(%arg0: i32) -> (i32, i32) {
    %c0_i32 = arith.constant 0 : i32
    %c0_i32_0 = arith.constant 0 : i32
    %c0_i32_1 = arith.constant 0 : i32
    return %c0_i32, %c0_i32_0 : i32, i32
  }
  func.func @transform_3(%arg0: i32) -> (i32, i32) {
    %c0_i32 = arith.constant 0 : i32
    %c0_i32_0 = arith.constant 0 : i32
    %c0_i32_1 = arith.constant 0 : i32
    return %c0_i32, %c0_i32_0 : i32, i32
  }
  func.func @transform_4(%arg0: i32) -> (i32, i32, i32) {
    %c0_i32 = arith.constant 0 : i32
    %c0_i32_0 = arith.constant 0 : i32
    %c0_i32_1 = arith.constant 0 : i32
    return %arg0, %c0_i32, %c0_i32_0 : i32, i32, i32
  }
}

</mosaic_0001>

<llo_original>
// kernel: tpu_custom_call.1
$region0: #{tpu_custom_call.1}
  #allocation0 [shape = 'u32[]', space=smem, size = 0x4, offset = 0x4, fixed_abs, tag = 'smem constant byte address 0x4 - core index']
  #allocation1 [shape = 'u32[72,128]{1,0:T(1,128)}', space=vmem, size = 0x9000, scoped, tag = 'internal scratch']
  %s0 = inlined_call_operand.hbm [shape: f32[2,8,32], index: 0, kind: input, shape index: {}]
  %s1 = inlined_call_operand.hbm [shape: bf16[32,96], index: 1, kind: input, shape index: {}]
  %s2 = inlined_call_operand.hbm [shape: bf16[32,32], index: 2, kind: input, shape index: {}]
  %s3 = inlined_call_operand.vmem [shape: f32[1,32], index: 3, kind: input, shape index: {}]
  %s4 = inlined_call_operand.hbm [shape: f32[2,8,32], index: 4, kind: output, shape index: {}]
  %s5 = sld [smem:[#allocation0]]
  $region61: #{tpu_custom_call.1} parent=0
    _
  %s7 = ssub.s32 1, %s5
  %s8 = scalar_select 0, %s7, %s5
  $region1: #{tpu_custom_call.1} parent=0
    #allocation2 [shape = 'u8[8192]{0}', space=vmem, size = 0x2000, scoped, tag = 'input window, operand 0']
    #allocation3 [shape = 's32[2]{0}', space=sflag, size = 0x8, scoped, tag = 'scoped memory for tpu_custom_call.1']
    #allocation4 [shape = 's32[2]{0}', space=sflag, size = 0x8, scoped, tag = 'scoped memory for tpu_custom_call.1']
    #allocation5 [shape = 'u8[8192]{0}', space=vmem, size = 0x2000, scoped, tag = 'input window, operand 1, single buffered']
    #allocation6 [shape = 's32[1]{0}', space=sflag, size = 0x4, scoped, tag = 'scoped memory for tpu_custom_call.1']
    #allocation7 [shape = 'u8[8192]{0}', space=vmem, size = 0x2000, scoped, tag = 'input window, operand 2, single buffered']
    #allocation8 [shape = 'u8[8192]{0}', space=vmem, size = 0x2000, scoped, tag = 'output window, operand 0']
    %9 = vsyncpa [#allocation3], 0
    %s10 = scalar_lea.sflag [#allocation3], 1
    %11 = vsyncpa %s10, 0
    %12 = vsyncpa [#allocation6], 0
    %13 = vsyncpa [#allocation4], 0
    %s14 = scalar_lea.sflag [#allocation4], 1
    %15 = vsyncpa %s14, 0
    loop: start=0, step=1, limit=4
    $region2: #{tpu_custom_call.1} parent=1 // loop_pre_header
      _
    $region3: #{tpu_custom_call.1} parent=1 // loop_header
      %s17 = sphi 0, %s21
      %p18 = scmp.ge.s32.totalorder %s17, 4
      %s27 = sphi 0, %s29
      %s30 = sphi 0, %s27
      %s31 = sphi 0, %s30
      %s47 = sphi 0, %s31
      %s51 = sphi 0, %s51
      %s53 = sphi 0, %s51
      %s54 = sphi 0, %s53
      %s68 = sphi 0, %s54
      %s72 = sphi 0, %s72
      %s74 = sphi 0, %s72
      %s75 = sphi 0, %s74
      %s89 = sphi 0, %s75
      %s93 = sphi 0, %s93
      %s95 = sphi 0, %s93
      %s96 = sphi 0, %s95
      %s110 = sphi 0, %s96
      %s116 = sphi 0, %s118
      %s119 = sphi 0, %s116
      %s120 = sphi 0, %s119
      %s136 = sphi 0, %s120
    $region4: #{tpu_custom_call.1} parent=1 // loop_header_branch
      %20 = sbr.rel (%p18) target = $region8
    $region5: #{tpu_custom_call.1} parent=1 // loop_body
      %s22 = ssub.s32 %s17, 1
      %s23 = ssub.s32 %s17, 2
      %s24 = sadd.s32 %s17, 1
      %s25 = ssub.s32 %s17, %s24
      %p26 = scmp.eq.s32.totalorder %s25, 0
      %s28 = sadd.s32 %s27, 1
      %s29 = scalar_select %p26, %s27, %s28
      %p32 = pneg %p26
      %p33 = scmp.eq.s32.totalorder %s17, 1
      %p34 = por %p32, %p33
      %p35 = scmp.ne.s32.totalorder %s27, %s30
      %p36 = scmp.eq.s32.totalorder %s17, 0
      %p37 = por %p35, %p36
      %p38 = scmp.ne.s32.totalorder %s27, %s30
      %p39 = scmp.eq.s32.totalorder %s22, 1
      %p40 = por %p38, %p39
      %p41 = scmp.ne.s32.totalorder %s30, %s31
      %p42 = scmp.eq.s32.totalorder %s22, 0
      %p43 = por %p41, %p42
      %p44 = scmp.ne.s32.totalorder %s30, %s31
      %p45 = scmp.eq.s32.totalorder %s23, 1
      %p46 = por %p44, %p45
      %p48 = scmp.ne.s32.totalorder %s31, %s47
      %p49 = scmp.eq.s32.totalorder %s23, 0
      %p50 = por %p48, %p49
      %s52 = sadd.s32 %s51, 1
      %p55 = scmp.eq.s32.totalorder %s17, 1
      %p56 = scmp.ne.s32.totalorder %s51, %s53
      %p57 = scmp.eq.s32.totalorder %s17, 0
      %p58 = por %p56, %p57
      %p59 = scmp.ne.s32.totalorder %s51, %s53
      %p60 = scmp.eq.s32.totalorder %s22, 1
      %p61 = por %p59, %p60
      %p62 = scmp.ne.s32.totalorder %s53, %s54
      %p63 = scmp.eq.s32.totalorder %s22, 0
      %p64 = por %p62, %p63
      %p65 = scmp.ne.s32.totalorder %s53, %s54
      %p66 = scmp.eq.s32.totalorder %s23, 1
      %p67 = por %p65, %p66
      %p69 = scmp.ne.s32.totalorder %s54, %s68
      %p70 = scmp.eq.s32.totalorder %s23, 0
      %p71 = por %p69, %p70
      %s73 = sadd.s32 %s72, 1
      %p76 = scmp.eq.s32.totalorder %s17, 1
      %p77 = scmp.ne.s32.totalorder %s72, %s74
      %p78 = scmp.eq.s32.totalorder %s17, 0
      %p79 = por %p77, %p78
      %p80 = scmp.ne.s32.totalorder %s72, %s74
      %p81 = scmp.eq.s32.totalorder %s22, 1
      %p82 = por %p80, %p81
      %p83 = scmp.ne.s32.totalorder %s74, %s75
      %p84 = scmp.eq.s32.totalorder %s22, 0
      %p85 = por %p83, %p84
      %p86 = scmp.ne.s32.totalorder %s74, %s75
      %p87 = scmp.eq.s32.totalorder %s23, 1
      %p88 = por %p86, %p87
      %p90 = scmp.ne.s32.totalorder %s75, %s89
      %p91 = scmp.eq.s32.totalorder %s23, 0
      %p92 = por %p90, %p91
      %s94 = sadd.s32 %s93, 1
      %p97 = scmp.eq.s32.totalorder %s17, 1
      %p98 = scmp.ne.s32.totalorder %s93, %s95
      %p99 = scmp.eq.s32.totalorder %s17, 0
      %p100 = por %p98, %p99
      %p101 = scmp.ne.s32.totalorder %s93, %s95
      %p102 = scmp.eq.s32.totalorder %s22, 1
      %p103 = por %p101, %p102
      %p104 = scmp.ne.s32.totalorder %s95, %s96
      %p105 = scmp.eq.s32.totalorder %s22, 0
      %p106 = por %p104, %p105
      %p107 = scmp.ne.s32.totalorder %s95, %s96
      %p108 = scmp.eq.s32.totalorder %s23, 1
      %p109 = por %p107, %p108
      %p111 = scmp.ne.s32.totalorder %s96, %s110
      %p112 = scmp.eq.s32.totalorder %s23, 0
      %p113 = por %p111, %p112
      %s114 = ssub.s32 %s17, %s24
      %p115 = scmp.eq.s32.totalorder %s114, 0
      %s117 = sadd.s32 %s116, 1
      %s118 = scalar_select %p115, %s116, %s117
      %p121 = pneg %p115
      %p122 = scmp.eq.s32.totalorder %s17, 1
      %p123 = por %p121, %p122
      %p124 = scmp.ne.s32.totalorder %s116, %s119
      %p125 = scmp.eq.s32.totalorder %s17, 0
      %p126 = por %p124, %p125
      %p127 = scmp.ne.s32.totalorder %s116, %s119
      %p128 = scmp.eq.s32.totalorder %s22, 1
      %p129 = por %p127, %p128
      %p130 = scmp.ne.s32.totalorder %s119, %s120
      %p131 = scmp.eq.s32.totalorder %s22, 0
      %p132 = por %p130, %p131
      %p133 = scmp.ne.s32.totalorder %s119, %s120
      %p134 = scmp.eq.s32.totalorder %s23, 1
      %p135 = por %p133, %p134
      %p137 = scmp.ne.s32.totalorder %s120, %s136
      %p138 = scmp.eq.s32.totalorder %s23, 0
      %p139 = por %p137, %p138
      %p140 = scmp.le.s32.totalorder 1, %s17
      %p141 = scmp.lt.s32.totalorder %s17, 3
      %p142 = pnand %p140, %p141
      %p143 = pneg %p142
      // Predicated region
      $region9: #{tpu_custom_call.1} parent=5 // pred_check
        _
      $region10: #{tpu_custom_call.1} parent=5 // pred_check_branch
        %145 = sbr.rel (%p142) target = $region12
      $region11: #{tpu_custom_call.1} parent=5 // pred_region
        %s146 = ssub.s32 %s17, 1
        // Predicated region
        $region13: #{tpu_custom_call.1} parent=11 // pred_check
          %p147 = pneg %p64
        $region14: #{tpu_custom_call.1} parent=11 // pred_check_branch
          %149 = sbr.rel (%p147) target = $region16
        $region15: #{tpu_custom_call.1} parent=11 // pred_region
          %151 = vsyncadd [#allocation6], 0
          %s152 = sshll.u32 %s1, 4
          %s153 = int_to_ptr.hbm [resolvable:$true] %s152
          %s154 = sshll.u32 [#allocation5], 4
          %s155 = int_to_ptr.vmem [resolvable:$true] %s154
          %160 = dma.hbm_to_vmem [thread:$0]  %s153, 256, %s155, [#allocation6], 64, 64, 4
        $region16: #{tpu_custom_call.1} parent=11 // pred_fallthru
          _
        // Predicated region
        $region17: #{tpu_custom_call.1} parent=11 // pred_check
          %p161 = pneg %p85
        $region18: #{tpu_custom_call.1} parent=11 // pred_check_branch
          %163 = sbr.rel (%p161) target = $region20
        $region19: #{tpu_custom_call.1} parent=11 // pred_region
          %165 = vsyncadd [#allocation6], 0
          %s166 = sshll.u32 %s2, 4
          %s167 = int_to_ptr.hbm [resolvable:$true] %s166
          %s168 = sshll.u32 [#allocation7], 4
          %s169 = int_to_ptr.vmem [resolvable:$true] %s168
          %174 = dma.hbm_to_vmem [thread:$0]  %s167, 256, %s169, [#allocation6], 64, 64, 4
        $region20: #{tpu_custom_call.1} parent=11 // pred_fallthru
          _
        // Predicated region
        $region21: #{tpu_custom_call.1} parent=11 // pred_check
          %p175 = pneg %p106
        $region22: #{tpu_custom_call.1} parent=11 // pred_check_branch
          %177 = sbr.rel (%p175) target = $region24
        $region23: #{tpu_custom_call.1} parent=11 // pred_region
          _
        $region24: #{tpu_custom_call.1} parent=11 // pred_fallthru
          _
      $region12: #{tpu_custom_call.1} parent=5 // pred_fallthru
        _
      %p178 = scmp.lt.s32.totalorder %s17, 2
      // Predicated region
      $region25: #{tpu_custom_call.1} parent=5 // pred_check
        %p179 = pneg %p178
      $region26: #{tpu_custom_call.1} parent=5 // pred_check_branch
        %181 = sbr.rel (%p179) target = $region28
      $region27: #{tpu_custom_call.1} parent=5 // pred_region
        // Predicated region
        $region29: #{tpu_custom_call.1} parent=27 // pred_check
          %p182 = pneg %p37
        $region30: #{tpu_custom_call.1} parent=27 // pred_check_branch
          %184 = sbr.rel (%p182) target = $region32
        $region31: #{tpu_custom_call.1} parent=27 // pred_region
          %s185 = sand.u32 %s27, 1
          %s186 = scalar_lea.sflag [#allocation3], %s185
          %s187 = sand.u32 %s27, 1
          %s188 = smul.addr %s187, 8
          %s189 = scalar_lea.vmem [#allocation2], %s188
          %191 = vsyncadd %s186, 0
          %s192 = smul.addr %s17, 8
          %s193 = scalar_lea.hbm %s0, %s192
          %s195 = sshll.u32 %s193, 4
          %s196 = int_to_ptr.hbm [resolvable:$true] %s195
          %s197 = sshll.u32 %s189, 4
          %s198 = int_to_ptr.vmem [resolvable:$true] %s197
          %200 = dma.hbm_to_vmem [thread:$0]  %s196, 128, %s198, %s186
        $region32: #{tpu_custom_call.1} parent=27 // pred_fallthru
          _
      $region28: #{tpu_custom_call.1} parent=5 // pred_fallthru
        _
      %p201 = scmp.le.s32.totalorder 1, %s17
      %p202 = scmp.lt.s32.totalorder %s17, 3
      %p203 = pnand %p201, %p202
      %p204 = pneg %p203
      // Predicated region
      $region33: #{tpu_custom_call.1} parent=5 // pred_check
        _
      $region34: #{tpu_custom_call.1} parent=5 // pred_check_branch
        %206 = sbr.rel (%p203) target = $region36
      $region35: #{tpu_custom_call.1} parent=5 // pred_region
        %s207 = ssub.s32 %s17, 1
        %s208 = sand.u32 %s30, 1
        %s209 = scalar_lea.sflag [#allocation3], %s208
        %s210 = sand.u32 %s30, 1
        %s211 = smul.addr %s210, 8
        %s212 = scalar_lea.vmem [#allocation2], %s211
        // Predicated region
        $region37: #{tpu_custom_call.1} parent=35 // pred_check
          %p213 = pneg %p43
        $region38: #{tpu_custom_call.1} parent=35 // pred_check_branch
          %215 = sbr.rel (%p213) target = $region40
        $region39: #{tpu_custom_call.1} parent=35 // pred_region
          %217 = dma.done %s209, 128
        $region40: #{tpu_custom_call.1} parent=35 // pred_fallthru
          _
        // Predicated region
        $region41: #{tpu_custom_call.1} parent=35 // pred_check
          %p218 = pneg %p64
        $region42: #{tpu_custom_call.1} parent=35 // pred_check_branch
          %220 = sbr.rel (%p218) target = $region44
        $region43: #{tpu_custom_call.1} parent=35 // pred_region
          %222 = dma.done [#allocation6], 256
        $region44: #{tpu_custom_call.1} parent=35 // pred_fallthru
          _
        // Predicated region
        $region45: #{tpu_custom_call.1} parent=35 // pred_check
          %p223 = pneg %p85
        $region46: #{tpu_custom_call.1} parent=35 // pred_check_branch
          %225 = sbr.rel (%p223) target = $region48
        $region47: #{tpu_custom_call.1} parent=35 // pred_region
          %227 = dma.done [#allocation6], 256
        $region48: #{tpu_custom_call.1} parent=35 // pred_fallthru
          _
        %s228 = sand.u32 %s30, 1
        %s229 = scalar_lea.sflag [#allocation3], %s228
        %s230 = sand.u32 %s30, 1
        %s231 = smul.addr %s230, 8
        %s232 = scalar_lea.vmem [#allocation2], %s231
        %p233 = pneg %p43
        %p234 = pneg %p40
        %p235 = pneg %p64
        %p236 = pneg %p61
        %p237 = pneg %p85
        %p238 = pneg %p82
        %p239 = pneg %p106
        %p240 = pneg %p103
        %p241 = pneg %p132
        %p242 = pneg %p129
        %s243 = sand.u32 %s119, 1
        %s244 = scalar_lea.sflag [#allocation4], %s243
        %s245 = sand.u32 %s119, 1
        %s246 = smul.addr %s245, 8
        %s247 = scalar_lea.vmem [#allocation8], %s246
        %v249 = vld [vmem:[%s212] sm:$0xff]
        %v250 = vpack.c.bf16 %v249, %v249
        %v251 = vld [vmem:[#allocation5] sm:$0xf]
        %v252 = vld [vmem:[#allocation5 + $0x4] sm:$0xf]
        %v253 = vld [vmem:[#allocation5 + $0x8] sm:$0xf]
        %v254 = vld [vmem:[#allocation5 + $0xc] sm:$0xf]
        %v259 = vunpack.c.l.b16 %v251
        %v260 = vunpack.c.l.b16 %v252
        %v261 = vunpack.c.l.b16 %v253
        %v262 = vunpack.c.l.b16 %v254
        %v263 = vpack.c.b16 %v260, %v259
        %v264 = vpack.c.b16 %v262, %v261
        %vm267 = vcmask 261120
        %v269 = vsel %vm267, %v250, 0
        %271 = vmatpush.bf16.msra.mxu0 0
        %272 = vmatpush.bf16.msra.mxu0 0
        %273 = vmatpush.bf16.msra.mxu0 0
        %274 = vmatpush.bf16.msra.mxu0 0
        %275 = vmatpush.bf16.msra.mxu0 0
        %276 = vmatpush.bf16.msra.mxu0 0
        %277 = vmatpush.bf16.msra.mxu0 %v264
        %278 = vmatpush.bf16.msra.mxu0 %v263
        %279 = vmatmul.bf16.gmra.mxu0 %v269
        %v280 = vpop.f32.mrf.mxu0
        %v281 = vadd.f32 0.0, %v280
        %v282 = vpop.f32.mrf.mxu0
        %283 = vdwg.mxu0
        %285 = vrot.lane.b32.xlu0 %v281, 120
        %v286 = vpop.permute.xlu0 %285
        %288 = vrot.lane.b32.xlu0 %v281, 112
        %v289 = vpop.permute.xlu0 %288
        %291 = vrot.lane.b32.xlu0 %v281, 104
        %v292 = vpop.permute.xlu0 %291
        %v294 = vpack.c.bf16 %v281, %v281
        %v295 = vpack.c.bf16 %v286, %v286
        %v296 = vpack.c.bf16 %v289, %v289
        %v297 = vpack.c.bf16 %v292, %v292
        %v298 = vlaneseq
        %v299 = vshrl.u32 %v298, 7
        %v300 = vlaneseq
        %v301 = vand.u32 %v300, 127
        %vm302 = vcmp.le.s32.totalorder %v301, %v299
        %v304 = vunpack.c.l.b16 %v294
        %v305 = vpack.c.b16 %v304, %v304
        %306 = vrot.lane.b32.xlu0 %v305, 96
        %v307 = vpop.permute.xlu0 %306
        %vm308 = vcmask 64512
        %v310 = vsel %vm308, %v294, 0
        %v313 = vsel %vm308, %v307, 0
        %315 = vmatpush.bf16.xpose.msra.mxu0 0
        %316 = vmatpush.bf16.xpose.msra.mxu0 0
        %317 = vmatpush.bf16.xpose.msra.mxu0 0
        %318 = vmatpush.bf16.xpose.msra.mxu0 0
        %319 = vmatpush.bf16.xpose.msra.mxu0 0
        %320 = vmatpush.bf16.xpose.msra.mxu0 0
        %321 = vmatpush.bf16.xpose.msra.mxu0 0
        %322 = vmatpush.bf16.xpose.msra.mxu0 %v313
        %323 = vmatmul.bf16.gmra.mxu0 %v310
        %v324 = vpop.f32.mrf.mxu0
        %v325 = vadd.f32 0.0, %v324
        %v326 = vpop.f32.mrf.mxu0
        %327 = vdwg.mxu0
        %v329 = vunpack.c.l.b16 %v295
        %v330 = vpack.c.b16 %v329, %v329
        %331 = vrot.lane.b32.xlu0 %v330, 96
        %v332 = vpop.permute.xlu0 %331
        %v334 = vsel %vm308, %v295, 0
        %v337 = vsel %vm308, %v332, 0
        %339 = vmatpush.bf16.xpose.msra.mxu0 0
        %340 = vmatpush.bf16.xpose.msra.mxu0 0
        %341 = vmatpush.bf16.xpose.msra.mxu0 0
        %342 = vmatpush.bf16.xpose.msra.mxu0 0
        %343 = vmatpush.bf16.xpose.msra.mxu0 0
        %344 = vmatpush.bf16.xpose.msra.mxu0 0
        %345 = vmatpush.bf16.xpose.msra.mxu0 0
        %346 = vmatpush.bf16.xpose.msra.mxu0 %v337
        %347 = vmatmul.bf16.gmra.mxu0 %v334
        %v348 = vpop.f32.mrf.mxu0
        %v349 = vadd.f32 0.0, %v348
        %v350 = vpop.f32.mrf.mxu0
        %351 = vdwg.mxu0
        %v353 = vunpack.c.l.b16 %v296
        %v354 = vpack.c.b16 %v353, %v353
        %355 = vrot.lane.b32.xlu0 %v354, 96
        %v356 = vpop.permute.xlu0 %355
        %v358 = vsel %vm308, %v296, 0
        %v361 = vsel %vm308, %v356, 0
        %363 = vmatpush.bf16.xpose.msra.mxu0 0
        %364 = vmatpush.bf16.xpose.msra.mxu0 0
        %365 = vmatpush.bf16.xpose.msra.mxu0 0
        %366 = vmatpush.bf16.xpose.msra.mxu0 0
        %367 = vmatpush.bf16.xpose.msra.mxu0 0
        %368 = vmatpush.bf16.xpose.msra.mxu0 0
        %369 = vmatpush.bf16.xpose.msra.mxu0 0
        %370 = vmatpush.bf16.xpose.msra.mxu0 %v361
        %371 = vmatmul.bf16.gmra.mxu0 %v358
        %v372 = vpop.f32.mrf.mxu0
        %v373 = vadd.f32 0.0, %v372
        %v374 = vpop.f32.mrf.mxu0
        %375 = vdwg.mxu0
        %v377 = vunpack.c.l.b16 %v297
        %v378 = vpack.c.b16 %v377, %v377
        %379 = vrot.lane.b32.xlu0 %v378, 96
        %v380 = vpop.permute.xlu0 %379
        %v382 = vsel %vm308, %v297, 0
        %v385 = vsel %vm308, %v380, 0
        %387 = vmatpush.bf16.xpose.msra.mxu0 0
        %388 = vmatpush.bf16.xpose.msra.mxu0 0
        %389 = vmatpush.bf16.xpose.msra.mxu0 0
        %390 = vmatpush.bf16.xpose.msra.mxu0 0
        %391 = vmatpush.bf16.xpose.msra.mxu0 0
        %392 = vmatpush.bf16.xpose.msra.mxu0 0
        %393 = vmatpush.bf16.xpose.msra.mxu0 0
        %394 = vmatpush.bf16.xpose.msra.mxu0 %v385
        %395 = vmatmul.bf16.gmra.mxu0 %v382
        %v396 = vpop.f32.mrf.mxu0
        %v397 = vadd.f32 0.0, %v396
        %v398 = vpop.f32.mrf.mxu0
        %399 = vdwg.mxu0
        %v400 = vsel %vm302, 1, 0
        %vm401 = vcmp.eq.s32.totalorder %v400, 1
        %v402 = vsel %vm401, %v325, -inf
        %v403 = vsel %vm401, %v349, -inf
        %v404 = vsel %vm401, %v373, -inf
        %v405 = vsel %vm401, %v397, -inf
        %v406 = vsel %vm308, %v402, -inf
        %407 = vmax.xlane.f32.xlu0 %v406
        %v408 = vpop.xlane.xlu0 %407
        %v409 = vsel %vm308, %v403, -inf
        %410 = vmax.xlane.f32.xlu0 %v409
        %v411 = vpop.xlane.xlu0 %410
        %v412 = vsel %vm308, %v404, -inf
        %413 = vmax.xlane.f32.xlu0 %v412
        %v414 = vpop.xlane.xlu0 %413
        %v415 = vsel %vm308, %v405, -inf
        %416 = vmax.xlane.f32.xlu0 %v415
        %v417 = vpop.xlane.xlu0 %416
        %v418 = vsub.f32 %v402, %v408
        %v419 = vsub.f32 %v403, %v411
        %v420 = vsub.f32 %v404, %v414
        %v421 = vsub.f32 %v405, %v417
        %v422 = vmul.f32 %v418, 1.442695
        %v423 = vpow.pop %v422
        %v424 = vmul.f32 %v419, 1.442695
        %v425 = vpow.pop %v424
        %v426 = vmul.f32 %v420, 1.442695
        %v427 = vpow.pop %v426
        %v428 = vmul.f32 %v421, 1.442695
        %v429 = vpow.pop %v428
        %v430 = vsel %vm308, %v423, 0.0
        %431 = vadd.xlane.f32.xlu0 %v430
        %v432 = vpop.xlane.xlu0 %431
        %v433 = vsel %vm308, %v425, 0.0
        %434 = vadd.xlane.f32.xlu0 %v433
        %v435 = vpop.xlane.xlu0 %434
        %v436 = vsel %vm308, %v427, 0.0
        %437 = vadd.xlane.f32.xlu0 %v436
        %v438 = vpop.xlane.xlu0 %437
        %v439 = vsel %vm308, %v429, 0.0
        %440 = vadd.xlane.f32.xlu0 %v439
        %v441 = vpop.xlane.xlu0 %440
        %v442 = vrcp.pop %v432
        %v443 = vrcp.pop %v435
        %v444 = vrcp.pop %v438
        %v445 = vrcp.pop %v441
        %v446 = vmul.f32 %v423, %v442
        %v447 = vmul.f32 %v425, %v443
        %v448 = vmul.f32 %v427, %v444
        %v449 = vmul.f32 %v429, %v445
        %v450 = vpack.c.bf16 %v446, %v446
        %v451 = vpack.c.bf16 %v447, %v447
        %v452 = vpack.c.bf16 %v448, %v448
        %v453 = vpack.c.bf16 %v449, %v449
        %454 = vrot.lane.b32.xlu0 %v305, 64
        %v455 = vpop.permute.xlu0 %454
        %v457 = vsel %vm308, %v450, 0
        %vm459 = vcmask 1043456
        %v461 = vsel %vm459, %v455, 0
        %463 = vmatpush.bf16.msra.mxu0 0
        %464 = vmatpush.bf16.msra.mxu0 0
        %465 = vmatpush.bf16.msra.mxu0 0
        %466 = vmatpush.bf16.msra.mxu0 0
        %467 = vmatpush.bf16.msra.mxu0 0
        %468 = vmatpush.bf16.msra.mxu0 0
        %469 = vmatpush.bf16.msra.mxu0 0
        %470 = vmatpush.bf16.msra.mxu0 %v461
        %471 = vmatmul.bf16.gmra.mxu0 %v457
        %v472 = vpop.f32.mrf.mxu0
        %v473 = vadd.f32 0.0, %v472
        %v474 = vpop.f32.mrf.mxu0
        %475 = vdwg.mxu0
        %476 = vrot.lane.b32.xlu0 %v330, 64
        %v477 = vpop.permute.xlu0 %476
        %v479 = vsel %vm308, %v451, 0
        %v482 = vsel %vm459, %v477, 0
        %484 = vmatpush.bf16.msra.mxu0 0
        %485 = vmatpush.bf16.msra.mxu0 0
        %486 = vmatpush.bf16.msra.mxu0 0
        %487 = vmatpush.bf16.msra.mxu0 0
        %488 = vmatpush.bf16.msra.mxu0 0
        %489 = vmatpush.bf16.msra.mxu0 0
        %490 = vmatpush.bf16.msra.mxu0 0
        %491 = vmatpush.bf16.msra.mxu0 %v482
        %492 = vmatmul.bf16.gmra.mxu0 %v479
        %v493 = vpop.f32.mrf.mxu0
        %v494 = vadd.f32 0.0, %v493
        %v495 = vpop.f32.mrf.mxu0
        %496 = vdwg.mxu0
        %497 = vrot.lane.b32.xlu0 %v354, 64
        %v498 = vpop.permute.xlu0 %497
        %v500 = vsel %vm308, %v452, 0
        %v503 = vsel %vm459, %v498, 0
        %505 = vmatpush.bf16.msra.mxu0 0
        %506 = vmatpush.bf16.msra.mxu0 0
        %507 = vmatpush.bf16.msra.mxu0 0
        %508 = vmatpush.bf16.msra.mxu0 0
        %509 = vmatpush.bf16.msra.mxu0 0
        %510 = vmatpush.bf16.msra.mxu0 0
        %511 = vmatpush.bf16.msra.mxu0 0
        %512 = vmatpush.bf16.msra.mxu0 %v503
        %513 = vmatmul.bf16.gmra.mxu0 %v500
        %v514 = vpop.f32.mrf.mxu0
        %v515 = vadd.f32 0.0, %v514
        %v516 = vpop.f32.mrf.mxu0
        %517 = vdwg.mxu0
        %518 = vrot.lane.b32.xlu0 %v378, 64
        %v519 = vpop.permute.xlu0 %518
        %v521 = vsel %vm308, %v453, 0
        %v524 = vsel %vm459, %v519, 0
        %526 = vmatpush.bf16.msra.mxu0 0
        %527 = vmatpush.bf16.msra.mxu0 0
        %528 = vmatpush.bf16.msra.mxu0 0
        %529 = vmatpush.bf16.msra.mxu0 0
        %530 = vmatpush.bf16.msra.mxu0 0
        %531 = vmatpush.bf16.msra.mxu0 0
        %532 = vmatpush.bf16.msra.mxu0 0
        %533 = vmatpush.bf16.msra.mxu0 %v524
        %534 = vmatmul.bf16.gmra.mxu0 %v521
        %v535 = vpop.f32.mrf.mxu0
        %v536 = vadd.f32 0.0, %v535
        %v537 = vpop.f32.mrf.mxu0
        %538 = vdwg.mxu0
        %540 = vrot.lane.b32.xlu0 %v494, 8
        %v541 = vpop.permute.xlu0 %540
        %544 = vrot.lane.b32.xlu0 %v515, 16
        %v545 = vpop.permute.xlu0 %544
        %548 = vrot.lane.b32.xlu0 %v536, 24
        %v549 = vpop.permute.xlu0 %548
        %v551 = vsel %vm308, %v473, %v541
        %vm552 = vcmask 130048
        %v553 = vsel %vm552, %v551, %v545
        %vm554 = vcmask 195584
        %v555 = vsel %vm554, %v553, %v549
        %v556 = vpack.c.bf16 %v555, %v555
        %v557 = vld [vmem:[#allocation7] sm:$0xf]
        %v558 = vld [vmem:[#allocation7 + $0x4] sm:$0xf]
        %v559 = vld [vmem:[#allocation7 + $0x8] sm:$0xf]
        %v560 = vld [vmem:[#allocation7 + $0xc] sm:$0xf]
        %v561 = vld [vmem:[%s3] sm:$0x1]
        %v563 = vperm.slane %v561, 0
        %v569 = vunpack.c.l.b16 %v557
        %v570 = vunpack.c.l.b16 %v558
        %v571 = vunpack.c.l.b16 %v559
        %v572 = vunpack.c.l.b16 %v560
        %v573 = vpack.c.b16 %v570, %v569
        %v574 = vpack.c.b16 %v572, %v571
        %v578 = vsel %vm267, %v556, 0
        %580 = vmatpush.bf16.msra.mxu0 0
        %581 = vmatpush.bf16.msra.mxu0 0
        %582 = vmatpush.bf16.msra.mxu0 0
        %583 = vmatpush.bf16.msra.mxu0 0
        %584 = vmatpush.bf16.msra.mxu0 0
        %585 = vmatpush.bf16.msra.mxu0 0
        %586 = vmatpush.bf16.msra.mxu0 %v574
        %587 = vmatpush.bf16.msra.mxu0 %v573
        %588 = vmatmul.bf16.gmra.mxu0 %v578
        %v589 = vpop.f32.mrf.mxu0
        %v590 = vadd.f32 %v563, %v589
        %v591 = vpop.f32.mrf.mxu0
        %592 = vdwg.mxu0
        %593 = vst.msk [vmem:[%s247] sm:$0xff] %vm267, %v590
        %s594 = sand.u32 %s119, 1
        %s595 = scalar_lea.sflag [#allocation4], %s594
        %s596 = sand.u32 %s119, 1
        %s597 = smul.addr %s596, 8
        %s598 = scalar_lea.vmem [#allocation8], %s597
        // Predicated region
        $region49: #{tpu_custom_call.1} parent=35 // pred_check
          %p599 = pneg %p129
        $region50: #{tpu_custom_call.1} parent=35 // pred_check_branch
          %601 = sbr.rel (%p599) target = $region52
        $region51: #{tpu_custom_call.1} parent=35 // pred_region
          %603 = vsyncadd %s595, 0
          %s604 = smul.addr %s22, 8
          %s605 = scalar_lea.hbm %s4, %s604
          %s607 = sshll.u32 %s598, 4
          %s608 = int_to_ptr.vmem [resolvable:$true] %s607
          %s609 = sshll.u32 %s605, 4
          %s610 = int_to_ptr.hbm [resolvable:$true] %s609
          %612 = dma.vmem_to_hbm [thread:$0]  %s608, 128, %s610, %s595
        $region52: #{tpu_custom_call.1} parent=35 // pred_fallthru
          _
      $region36: #{tpu_custom_call.1} parent=5 // pred_fallthru
        _
      %p613 = scmp.le.s32.totalorder 2, %s17
      // Predicated region
      $region53: #{tpu_custom_call.1} parent=5 // pred_check
        %p614 = pneg %p613
      $region54: #{tpu_custom_call.1} parent=5 // pred_check_branch
        %616 = sbr.rel (%p614) target = $region56
      $region55: #{tpu_custom_call.1} parent=5 // pred_region
        %s617 = ssub.s32 %s17, 2
        // Predicated region
        $region57: #{tpu_custom_call.1} parent=55 // pred_check
          %p618 = pneg %p135
        $region58: #{tpu_custom_call.1} parent=55 // pred_check_branch
          %620 = sbr.rel (%p618) target = $region60
        $region59: #{tpu_custom_call.1} parent=55 // pred_region
          %s621 = sand.u32 %s120, 1
          %s622 = scalar_lea.sflag [#allocation4], %s621
          %s623 = sand.u32 %s120, 1
          %s624 = smul.addr %s623, 8
          %s625 = scalar_lea.vmem [#allocation8], %s624
          %627 = dma.done %s622, 128
        $region60: #{tpu_custom_call.1} parent=55 // pred_fallthru
          _
      $region56: #{tpu_custom_call.1} parent=5 // pred_fallthru
        _
    $region6: #{tpu_custom_call.1} parent=1 // loop_footer
      %s21 = sadd.s32 1, %s17
    $region7: #{tpu_custom_call.1} parent=1 // loop_footer_branch
      %16 = sbr.rel target = $region3
    $region8: #{tpu_custom_call.1} parent=1 // loop_exit
      _
    %628 = vsyncpa [#allocation3], 1
    %s629 = scalar_lea.sflag [#allocation3], 1
    %630 = vsyncpa %s629, 1
    %631 = vsyncpa [#allocation6], 1
    %632 = vsyncpa [#allocation4], 1
    %s633 = scalar_lea.sflag [#allocation4], 1
    %634 = vsyncpa %s633, 1

// kernel: tpu_custom_call.1
$region0: #{tpu_custom_call.1}
  #allocation0 [shape = 'u32[]', space=smem, size = 0x4, offset = 0x4, fixed_abs, tag = 'smem constant byte address 0x4 - core index']
  #allocation1 [shape = 'u32[72,128]{1,0:T(1,128)}', space=vmem, size = 0x9000, scoped, tag = 'internal scratch']
  %s0 = inlined_call_operand.hbm [shape: f32[2,8,32], index: 0, kind: input, shape index: {}]
  %s1 = inlined_call_operand.hbm [shape: bf16[32,96], index: 1, kind: input, shape index: {}]
  %s2 = inlined_call_operand.hbm [shape: bf16[32,32], index: 2, kind: input, shape index: {}]
  %s3 = inlined_call_operand.vmem [shape: f32[1,32], index: 3, kind: input, shape index: {}]
  %s4 = inlined_call_operand.hbm [shape: f32[2,8,32], index: 4, kind: output, shape index: {}]
  %s5 = sld [smem:[#allocation0]]
  $region61: #{tpu_custom_call.1} parent=0
    _
  %s7 = ssub.s32 1, %s5
  %s8 = scalar_select 0, %s7, %s5
  $region1: #{tpu_custom_call.1} parent=0
    #allocation2 [shape = 'u8[8192]{0}', space=vmem, size = 0x2000, scoped, tag = 'input window, operand 0']
    #allocation3 [shape = 's32[2]{0}', space=sflag, size = 0x8, scoped, tag = 'scoped memory for tpu_custom_call.1']
    #allocation4 [shape = 's32[2]{0}', space=sflag, size = 0x8, scoped, tag = 'scoped memory for tpu_custom_call.1']
    #allocation5 [shape = 'u8[8192]{0}', space=vmem, size = 0x2000, scoped, tag = 'input window, operand 1, single buffered']
    #allocation6 [shape = 's32[1]{0}', space=sflag, size = 0x4, scoped, tag = 'scoped memory for tpu_custom_call.1']
    #allocation7 [shape = 'u8[8192]{0}', space=vmem, size = 0x2000, scoped, tag = 'input window, operand 2, single buffered']
    #allocation8 [shape = 'u8[8192]{0}', space=vmem, size = 0x2000, scoped, tag = 'output window, operand 0']
    %9 = vsyncpa [#allocation3], 0
    %s10 = scalar_lea.sflag [#allocation3], 1
    %11 = vsyncpa %s10, 0
    %12 = vsyncpa [#allocation6], 0
    %13 = vsyncpa [#allocation4], 0
    %s14 = scalar_lea.sflag [#allocation4], 1
    %15 = vsyncpa %s14, 0
    loop: start=0, step=1, limit=4
    $region2: #{tpu_custom_call.1} parent=1 // loop_pre_header
      _
    $region3: #{tpu_custom_call.1} parent=1 // loop_header
      %s17 = sphi 0, %s21
      %p18 = scmp.ge.s32.totalorder %s17, 4
      %s27 = sphi 0, %s29
      %s30 = sphi 0, %s27
      %s31 = sphi 0, %s30
      %s47 = sphi 0, %s31
      %s51 = sphi 0, %s51
      %s53 = sphi 0, %s51
      %s54 = sphi 0, %s53
      %s68 = sphi 0, %s54
      %s72 = sphi 0, %s72
      %s74 = sphi 0, %s72
      %s75 = sphi 0, %s74
      %s89 = sphi 0, %s75
      %s93 = sphi 0, %s93
      %s95 = sphi 0, %s93
      %s96 = sphi 0, %s95
      %s110 = sphi 0, %s96
      %s116 = sphi 0, %s118
      %s119 = sphi 0, %s116
      %s120 = sphi 0, %s119
      %s136 = sphi 0, %s120
    $region4: #{tpu_custom_call.1} parent=1 // loop_header_branch
      %20 = sbr.rel (%p18) target = $region8
    $region5: #{tpu_custom_call.1} parent=1 // loop_body
      %s22 = ssub.s32 %s17, 1
      %s23 = ssub.s32 %s17, 2
      %s24 = sadd.s32 %s17, 1
      %s25 = ssub.s32 %s17, %s24
      %p26 = scmp.eq.s32.totalorder %s25, 0
      %s28 = sadd.s32 %s27, 1
      %s29 = scalar_select %p26, %s27, %s28
      %p32 = pneg %p26
      %p33 = scmp.eq.s32.totalorder %s17, 1
      %p34 = por %p32, %p33
      %p35 = scmp.ne.s32.totalorder %s27, %s30
      %p36 = scmp.eq.s32.totalorder %s17, 0
      %p37 = por %p35, %p36
      %p38 = scmp.ne.s32.totalorder %s27, %s30
      %p39 = scmp.eq.s32.totalorder %s22, 1
      %p40 = por %p38, %p39
      %p41 = scmp.ne.s32.totalorder %s30, %s31
      %p42 = scmp.eq.s32.totalorder %s22, 0
      %p43 = por %p41, %p42
      %p44 = scmp.ne.s32.totalorder %s30, %s31
      %p45 = scmp.eq.s32.totalorder %s23, 1
      %p46 = por %p44, %p45
      %p48 = scmp.ne.s32.totalorder %s31, %s47
      %p49 = scmp.eq.s32.totalorder %s23, 0
      %p50 = por %p48, %p49
      %s52 = sadd.s32 %s51, 1
      %p55 = scmp.eq.s32.totalorder %s17, 1
      %p56 = scmp.ne.s32.totalorder %s51, %s53
      %p57 = scmp.eq.s32.totalorder %s17, 0
      %p58 = por %p56, %p57
      %p59 = scmp.ne.s32.totalorder %s51, %s53
      %p60 = scmp.eq.s32.totalorder %s22, 1
      %p61 = por %p59, %p60
      %p62 = scmp.ne.s32.totalorder %s53, %s54
      %p63 = scmp.eq.s32.totalorder %s22, 0
      %p64 = por %p62, %p63
      %p65 = scmp.ne.s32.totalorder %s53, %s54
      %p66 = scmp.eq.s32.totalorder %s23, 1
      %p67 = por %p65, %p66
      %p69 = scmp.ne.s32.totalorder %s54, %s68
      %p70 = scmp.eq.s32.totalorder %s23, 0
      %p71 = por %p69, %p70
      %s73 = sadd.s32 %s72, 1
      %p76 = scmp.eq.s32.totalorder %s17, 1
      %p77 = scmp.ne.s32.totalorder %s72, %s74
      %p78 = scmp.eq.s32.totalorder %s17, 0
      %p79 = por %p77, %p78
      %p80 = scmp.ne.s32.totalorder %s72, %s74
      %p81 = scmp.eq.s32.totalorder %s22, 1
      %p82 = por %p80, %p81
      %p83 = scmp.ne.s32.totalorder %s74, %s75
      %p84 = scmp.eq.s32.totalorder %s22, 0
      %p85 = por %p83, %p84
      %p86 = scmp.ne.s32.totalorder %s74, %s75
      %p87 = scmp.eq.s32.totalorder %s23, 1
      %p88 = por %p86, %p87
      %p90 = scmp.ne.s32.totalorder %s75, %s89
      %p91 = scmp.eq.s32.totalorder %s23, 0
      %p92 = por %p90, %p91
      %s94 = sadd.s32 %s93, 1
      %p97 = scmp.eq.s32.totalorder %s17, 1
      %p98 = scmp.ne.s32.totalorder %s93, %s95
      %p99 = scmp.eq.s32.totalorder %s17, 0
      %p100 = por %p98, %p99
      %p101 = scmp.ne.s32.totalorder %s93, %s95
      %p102 = scmp.eq.s32.totalorder %s22, 1
      %p103 = por %p101, %p102
      %p104 = scmp.ne.s32.totalorder %s95, %s96
      %p105 = scmp.eq.s32.totalorder %s22, 0
      %p106 = por %p104, %p105
      %p107 = scmp.ne.s32.totalorder %s95, %s96
      %p108 = scmp.eq.s32.totalorder %s23, 1
      %p109 = por %p107, %p108
      %p111 = scmp.ne.s32.totalorder %s96, %s110
      %p112 = scmp.eq.s32.totalorder %s23, 0
      %p113 = por %p111, %p112
      %s114 = ssub.s32 %s17, %s24
      %p115 = scmp.eq.s32.totalorder %s114, 0
      %s117 = sadd.s32 %s116, 1
      %s118 = scalar_select %p115, %s116, %s117
      %p121 = pneg %p115
      %p122 = scmp.eq.s32.totalorder %s17, 1
      %p123 = por %p121, %p122
      %p124 = scmp.ne.s32.totalorder %s116, %s119
      %p125 = scmp.eq.s32.totalorder %s17, 0
      %p126 = por %p124, %p125
      %p127 = scmp.ne.s32.totalorder %s116, %s119
      %p128 = scmp.eq.s32.totalorder %s22, 1
      %p129 = por %p127, %p128
      %p130 = scmp.ne.s32.totalorder %s119, %s120
      %p131 = scmp.eq.s32.totalorder %s22, 0
      %p132 = por %p130, %p131
      %p133 = scmp.ne.s32.totalorder %s119, %s120
      %p134 = scmp.eq.s32.totalorder %s23, 1
      %p135 = por %p133, %p134
      %p137 = scmp.ne.s32.totalorder %s120, %s136
      %p138 = scmp.eq.s32.totalorder %s23, 0
      %p139 = por %p137, %p138
      %p140 = scmp.le.s32.totalorder 1, %s17
      %p141 = scmp.lt.s32.totalorder %s17, 3
      %p142 = pnand %p140, %p141
      %p143 = pneg %p142
      // Predicated region
      $region9: #{tpu_custom_call.1} parent=5 // pred_check
        _
      $region10: #{tpu_custom_call.1} parent=5 // pred_check_branch
        %145 = sbr.rel (%p142) target = $region12
      $region11: #{tpu_custom_call.1} parent=5 // pred_region
        %s146 = ssub.s32 %s17, 1
        // Predicated region
        $region13: #{tpu_custom_call.1} parent=11 // pred_check
          %p147 = pneg %p64
        $region14: #{tpu_custom_call.1} parent=11 // pred_check_branch
          %149 = sbr.rel (%p147) target = $region16
        $region15: #{tpu_custom_call.1} parent=11 // pred_region
          %151 = vsyncadd [#allocation6], 0
          %s152 = sshll.u32 %s1, 4
          %s153 = int_to_ptr.hbm [resolvable:$true] %s152
          %s154 = sshll.u32 [#allocation5], 4
          %s155 = int_to_ptr.vmem [resolvable:$true] %s154
          %160 = dma.hbm_to_vmem [thread:$0]  %s153, 256, %s155, [#allocation6], 64, 64, 4
        $region16: #{tpu_custom_call.1} parent=11 // pred_fallthru
          _
        // Predicated region
        $region17: #{tpu_custom_call.1} parent=11 // pred_check
          %p161 = pneg %p85
        $region18: #{tpu_custom_call.1} parent=11 // pred_check_branch
          %163 = sbr.rel (%p161) target = $region20
        $region19: #{tpu_custom_call.1} parent=11 // pred_region
          %165 = vsyncadd [#allocation6], 0
          %s166 = sshll.u32 %s2, 4
          %s167 = int_to_ptr.hbm [resolvable:$true] %s166
          %s168 = sshll.u32 [#allocation7], 4
          %s169 = int_to_ptr.vmem [resolvable:$true] %s168
          %174 = dma.hbm_to_vmem [thread:$0]  %s167, 256, %s169, [#allocation6], 64, 64, 4
        $region20: #{tpu_custom_call.1} parent=11 // pred_fallthru
          _
        // Predicated region
        $region21: #{tpu_custom_call.1} parent=11 // pred_check
          %p175 = pneg %p106
        $region22: #{tpu_custom_call.1} parent=11 // pred_check_branch
          %177 = sbr.rel (%p175) target = $region24
        $region23: #{tpu_custom_call.1} parent=11 // pred_region
          _
        $region24: #{tpu_custom_call.1} parent=11 // pred_fallthru
          _
      $region12: #{tpu_custom_call.1} parent=5 // pred_fallthru
        _
      %p178 = scmp.lt.s32.totalorder %s17, 2
      // Predicated region
      $region25: #{tpu_custom_call.1} parent=5 // pred_check
        %p179 = pneg %p178
      $region26: #{tpu_custom_call.1} parent=5 // pred_check_branch
        %181 = sbr.rel (%p179) target = $region28
      $region27: #{tpu_custom_call.1} parent=5 // pred_region
        // Predicated region
        $region29: #{tpu_custom_call.1} parent=27 // pred_check
          %p182 = pneg %p37
        $region30: #{tpu_custom_call.1} parent=27 // pred_check_branch
          %184 = sbr.rel (%p182) target = $region32
        $region31: #{tpu_custom_call.1} parent=27 // pred_region
          %s185 = sand.u32 %s27, 1
          %s186 = scalar_lea.sflag [#allocation3], %s185
          %s187 = sand.u32 %s27, 1
          %s188 = smul.addr %s187, 8
          %s189 = scalar_lea.vmem [#allocation2], %s188
          %191 = vsyncadd %s186, 0
          %s192 = smul.addr %s17, 8
          %s193 = scalar_lea.hbm %s0, %s192
          %s195 = sshll.u32 %s193, 4
          %s196 = int_to_ptr.hbm [resolvable:$true] %s195
          %s197 = sshll.u32 %s189, 4
          %s198 = int_to_ptr.vmem [resolvable:$true] %s197
          %200 = dma.hbm_to_vmem [thread:$0]  %s196, 128, %s198, %s186
        $region32: #{tpu_custom_call.1} parent=27 // pred_fallthru
          _
      $region28: #{tpu_custom_call.1} parent=5 // pred_fallthru
        _
      %p201 = scmp.le.s32.totalorder 1, %s17
      %p202 = scmp.lt.s32.totalorder %s17, 3
      %p203 = pnand %p201, %p202
      %p204 = pneg %p203
      // Predicated region
      $region33: #{tpu_custom_call.1} parent=5 // pred_check
        _
      $region34: #{tpu_custom_call.1} parent=5 // pred_check_branch
        %206 = sbr.rel (%p203) target = $region36
      $region35: #{tpu_custom_call.1} parent=5 // pred_region
        %s207 = ssub.s32 %s17, 1
        %s208 = sand.u32 %s30, 1
        %s209 = scalar_lea.sflag [#allocation3], %s208
        %s210 = sand.u32 %s30, 1
        %s211 = smul.addr %s210, 8
        %s212 = scalar_lea.vmem [#allocation2], %s211
        // Predicated region
        $region37: #{tpu_custom_call.1} parent=35 // pred_check
          %p213 = pneg %p43
        $region38: #{tpu_custom_call.1} parent=35 // pred_check_branch
          %215 = sbr.rel (%p213) target = $region40
        $region39: #{tpu_custom_call.1} parent=35 // pred_region
          %217 = dma.done %s209, 128
        $region40: #{tpu_custom_call.1} parent=35 // pred_fallthru
          _
        // Predicated region
        $region41: #{tpu_custom_call.1} parent=35 // pred_check
          %p218 = pneg %p64
        $region42: #{tpu_custom_call.1} parent=35 // pred_check_branch
          %220 = sbr.rel (%p218) target = $region44
        $region43: #{tpu_custom_call.1} parent=35 // pred_region
          %222 = dma.done [#allocation6], 256
        $region44: #{tpu_custom_call.1} parent=35 // pred_fallthru
          _
        // Predicated region
        $region45: #{tpu_custom_call.1} parent=35 // pred_check
          %p223 = pneg %p85
        $region46: #{tpu_custom_call.1} parent=35 // pred_check_branch
          %225 = sbr.rel (%p223) target = $region48
        $region47: #{tpu_custom_call.1} parent=35 // pred_region
          %227 = dma.done [#allocation6], 256
        $region48: #{tpu_custom_call.1} parent=35 // pred_fallthru
          _
        %s228 = sand.u32 %s30, 1
        %s229 = scalar_lea.sflag [#allocation3], %s228
        %s230 = sand.u32 %s30, 1
        %s231 = smul.addr %s230, 8
        %s232 = scalar_lea.vmem [#allocation2], %s231
        %p233 = pneg %p43
        %p234 = pneg %p40
        %p235 = pneg %p64
        %p236 = pneg %p61
        %p237 = pneg %p85
        %p238 = pneg %p82
        %p239 = pneg %p106
        %p240 = pneg %p103
        %p241 = pneg %p132
        %p242 = pneg %p129
        %s243 = sand.u32 %s119, 1
        %s244 = scalar_lea.sflag [#allocation4], %s243
        %s245 = sand.u32 %s119, 1
        %s246 = smul.addr %s245, 8
        %s247 = scalar_lea.vmem [#allocation8], %s246
        %v249 = vld [vmem:[%s212] sm:$0xff]
        %v250 = vpack.c.bf16 %v249, %v249
        %v251 = vld [vmem:[#allocation5] sm:$0xf]
        %v252 = vld [vmem:[#allocation5 + $0x4] sm:$0xf]
        %v253 = vld [vmem:[#allocation5 + $0x8] sm:$0xf]
        %v254 = vld [vmem:[#allocation5 + $0xc] sm:$0xf]
        %v259 = vunpack.c.l.b16 %v251
        %v260 = vunpack.c.l.b16 %v252
        %v261 = vunpack.c.l.b16 %v253
        %v262 = vunpack.c.l.b16 %v254
        %v263 = vpack.c.b16 %v260, %v259
        %v264 = vpack.c.b16 %v262, %v261
        %vm267 = vcmask 261120
        %v269 = vsel %vm267, %v250, 0
        %271 = vmatpush.bf16.msra.mxu0 0
        %272 = vmatpush.bf16.msra.mxu0 0
        %273 = vmatpush.bf16.msra.mxu0 0
        %274 = vmatpush.bf16.msra.mxu0 0
        %275 = vmatpush.bf16.msra.mxu0 0
        %276 = vmatpush.bf16.msra.mxu0 0
        %277 = vmatpush.bf16.msra.mxu0 %v264
        %278 = vmatpush.bf16.msra.mxu0 %v263
        %279 = vmatmul.bf16.gmra.mxu0 %v269
        %v280 = vpop.f32.mrf.mxu0
        %v281 = vadd.f32 0.0, %v280
        %v282 = vpop.f32.mrf.mxu0
        %283 = vdwg.mxu0
        %285 = vrot.lane.b32.xlu0 %v281, 120
        %v286 = vpop.permute.xlu0 %285
        %288 = vrot.lane.b32.xlu0 %v281, 112
        %v289 = vpop.permute.xlu0 %288
        %291 = vrot.lane.b32.xlu0 %v281, 104
        %v292 = vpop.permute.xlu0 %291
        %v294 = vpack.c.bf16 %v281, %v281
        %v295 = vpack.c.bf16 %v286, %v286
        %v296 = vpack.c.bf16 %v289, %v289
        %v297 = vpack.c.bf16 %v292, %v292
        %v298 = vlaneseq
        %v299 = vshrl.u32 %v298, 7
        %v300 = vlaneseq
        %v301 = vand.u32 %v300, 127
        %vm302 = vcmp.le.s32.totalorder %v301, %v299
        %v304 = vunpack.c.l.b16 %v294
        %v305 = vpack.c.b16 %v304, %v304
        %306 = vrot.lane.b32.xlu0 %v305, 96
        %v307 = vpop.permute.xlu0 %306
        %vm308 = vcmask 64512
        %v310 = vsel %vm308, %v294, 0
        %v313 = vsel %vm308, %v307, 0
        %315 = vmatpush.bf16.xpose.msra.mxu0 0
        %316 = vmatpush.bf16.xpose.msra.mxu0 0
        %317 = vmatpush.bf16.xpose.msra.mxu0 0
        %318 = vmatpush.bf16.xpose.msra.mxu0 0
        %319 = vmatpush.bf16.xpose.msra.mxu0 0
        %320 = vmatpush.bf16.xpose.msra.mxu0 0
        %321 = vmatpush.bf16.xpose.msra.mxu0 0
        %322 = vmatpush.bf16.xpose.msra.mxu0 %v313
        %323 = vmatmul.bf16.gmra.mxu0 %v310
        %v324 = vpop.f32.mrf.mxu0
        %v325 = vadd.f32 0.0, %v324
        %v326 = vpop.f32.mrf.mxu0
        %327 = vdwg.mxu0
        %v329 = vunpack.c.l.b16 %v295
        %v330 = vpack.c.b16 %v329, %v329
        %331 = vrot.lane.b32.xlu0 %v330, 96
        %v332 = vpop.permute.xlu0 %331
        %v334 = vsel %vm308, %v295, 0
        %v337 = vsel %vm308, %v332, 0
        %339 = vmatpush.bf16.xpose.msra.mxu0 0
        %340 = vmatpush.bf16.xpose.msra.mxu0 0
        %341 = vmatpush.bf16.xpose.msra.mxu0 0
        %342 = vmatpush.bf16.xpose.msra.mxu0 0
        %343 = vmatpush.bf16.xpose.msra.mxu0 0
        %344 = vmatpush.bf16.xpose.msra.mxu0 0
        %345 = vmatpush.bf16.xpose.msra.mxu0 0
        %346 = vmatpush.bf16.xpose.msra.mxu0 %v337
        %347 = vmatmul.bf16.gmra.mxu0 %v334
        %v348 = vpop.f32.mrf.mxu0
        %v349 = vadd.f32 0.0, %v348
        %v350 = vpop.f32.mrf.mxu0
        %351 = vdwg.mxu0
        %v353 = vunpack.c.l.b16 %v296
        %v354 = vpack.c.b16 %v353, %v353
        %355 = vrot.lane.b32.xlu0 %v354, 96
        %v356 = vpop.permute.xlu0 %355
        %v358 = vsel %vm308, %v296, 0
        %v361 = vsel %vm308, %v356, 0
        %363 = vmatpush.bf16.xpose.msra.mxu0 0
        %364 = vmatpush.bf16.xpose.msra.mxu0 0
        %365 = vmatpush.bf16.xpose.msra.mxu0 0
        %366 = vmatpush.bf16.xpose.msra.mxu0 0
        %367 = vmatpush.bf16.xpose.msra.mxu0 0
        %368 = vmatpush.bf16.xpose.msra.mxu0 0
        %369 = vmatpush.bf16.xpose.msra.mxu0 0
        %370 = vmatpush.bf16.xpose.msra.mxu0 %v361
        %371 = vmatmul.bf16.gmra.mxu0 %v358
        %v372 = vpop.f32.mrf.mxu0
        %v373 = vadd.f32 0.0, %v372
        %v374 = vpop.f32.mrf.mxu0
        %375 = vdwg.mxu0
        %v377 = vunpack.c.l.b16 %v297
        %v378 = vpack.c.b16 %v377, %v377
        %379 = vrot.lane.b32.xlu0 %v378, 96
        %v380 = vpop.permute.xlu0 %379
        %v382 = vsel %vm308, %v297, 0
        %v385 = vsel %vm308, %v380, 0
        %387 = vmatpush.bf16.xpose.msra.mxu0 0
        %388 = vmatpush.bf16.xpose.msra.mxu0 0
        %389 = vmatpush.bf16.xpose.msra.mxu0 0
        %390 = vmatpush.bf16.xpose.msra.mxu0 0
        %391 = vmatpush.bf16.xpose.msra.mxu0 0
        %392 = vmatpush.bf16.xpose.msra.mxu0 0
        %393 = vmatpush.bf16.xpose.msra.mxu0 0
        %394 = vmatpush.bf16.xpose.msra.mxu0 %v385
        %395 = vmatmul.bf16.gmra.mxu0 %v382
        %v396 = vpop.f32.mrf.mxu0
        %v397 = vadd.f32 0.0, %v396
        %v398 = vpop.f32.mrf.mxu0
        %399 = vdwg.mxu0
        %v400 = vsel %vm302, 1, 0
        %vm401 = vcmp.eq.s32.totalorder %v400, 1
        %v402 = vsel %vm401, %v325, -inf
        %v403 = vsel %vm401, %v349, -inf
        %v404 = vsel %vm401, %v373, -inf
        %v405 = vsel %vm401, %v397, -inf
        %v406 = vsel %vm308, %v402, -inf
        %407 = vmax.xlane.f32.xlu0 %v406
        %v408 = vpop.xlane.xlu0 %407
        %v409 = vsel %vm308, %v403, -inf
        %410 = vmax.xlane.f32.xlu0 %v409
        %v411 = vpop.xlane.xlu0 %410
        %v412 = vsel %vm308, %v404, -inf
        %413 = vmax.xlane.f32.xlu0 %v412
        %v414 = vpop.xlane.xlu0 %413
        %v415 = vsel %vm308, %v405, -inf
        %416 = vmax.xlane.f32.xlu0 %v415
        %v417 = vpop.xlane.xlu0 %416
        %v418 = vsub.f32 %v402, %v408
        %v419 = vsub.f32 %v403, %v411
        %v420 = vsub.f32 %v404, %v414
        %v421 = vsub.f32 %v405, %v417
        %v422 = vmul.f32 %v418, 1.442695
        %v423 = vpow.pop %v422
        %v424 = vmul.f32 %v419, 1.442695
        %v425 = vpow.pop %v424
        %v426 = vmul.f32 %v420, 1.442695
        %v427 = vpow.pop %v426
        %v428 = vmul.f32 %v421, 1.442695
        %v429 = vpow.pop %v428
        %v430 = vsel %vm308, %v423, 0.0
        %431 = vadd.xlane.f32.xlu0 %v430
        %v432 = vpop.xlane.xlu0 %431
        %v433 = vsel %vm308, %v425, 0.0
        %434 = vadd.xlane.f32.xlu0 %v433
        %v435 = vpop.xlane.xlu0 %434
        %v436 = vsel %vm308, %v427, 0.0
        %437 = vadd.xlane.f32.xlu0 %v436
        %v438 = vpop.xlane.xlu0 %437
        %v439 = vsel %vm308, %v429, 0.0
        %440 = vadd.xlane.f32.xlu0 %v439
        %v441 = vpop.xlane.xlu0 %440
        %v442 = vrcp.pop %v432
        %v443 = vrcp.pop %v435
        %v444 = vrcp.pop %v438
        %v445 = vrcp.pop %v441
        %v446 = vmul.f32 %v423, %v442
        %v447 = vmul.f32 %v425, %v443
        %v448 = vmul.f32 %v427, %v444
        %v449 = vmul.f32 %v429, %v445
        %v450 = vpack.c.bf16 %v446, %v446
        %v451 = vpack.c.bf16 %v447, %v447
        %v452 = vpack.c.bf16 %v448, %v448
        %v453 = vpack.c.bf16 %v449, %v449
        %454 = vrot.lane.b32.xlu0 %v305, 64
        %v455 = vpop.permute.xlu0 %454
        %v457 = vsel %vm308, %v450, 0
        %vm459 = vcmask 1043456
        %v461 = vsel %vm459, %v455, 0
        %463 = vmatpush.bf16.msra.mxu0 0
        %464 = vmatpush.bf16.msra.mxu0 0
        %465 = vmatpush.bf16.msra.mxu0 0
        %466 = vmatpush.bf16.msra.mxu0 0
        %467 = vmatpush.bf16.msra.mxu0 0
        %468 = vmatpush.bf16.msra.mxu0 0
        %469 = vmatpush.bf16.msra.mxu0 0
        %470 = vmatpush.bf16.msra.mxu0 %v461
        %471 = vmatmul.bf16.gmra.mxu0 %v457
        %v472 = vpop.f32.mrf.mxu0
        %v473 = vadd.f32 0.0, %v472
        %v474 = vpop.f32.mrf.mxu0
        %475 = vdwg.mxu0
        %476 = vrot.lane.b32.xlu0 %v330, 64
        %v477 = vpop.permute.xlu0 %476
        %v479 = vsel %vm308, %v451, 0
        %v482 = vsel %vm459, %v477, 0
        %484 = vmatpush.bf16.msra.mxu0 0
        %485 = vmatpush.bf16.msra.mxu0 0
        %486 = vmatpush.bf16.msra.mxu0 0
        %487 = vmatpush.bf16.msra.mxu0 0
        %488 = vmatpush.bf16.msra.mxu0 0
        %489 = vmatpush.bf16.msra.mxu0 0
        %490 = vmatpush.bf16.msra.mxu0 0
        %491 = vmatpush.bf16.msra.mxu0 %v482
        %492 = vmatmul.bf16.gmra.mxu0 %v479
        %v493 = vpop.f32.mrf.mxu0
        %v494 = vadd.f32 0.0, %v493
        %v495 = vpop.f32.mrf.mxu0
        %496 = vdwg.mxu0
        %497 = vrot.lane.b32.xlu0 %v354, 64
        %v498 = vpop.permute.xlu0 %497
        %v500 = vsel %vm308, %v452, 0
        %v503 = vsel %vm459, %v498, 0
        %505 = vmatpush.bf16.msra.mxu0 0
        %506 = vmatpush.bf16.msra.mxu0 0
        %507 = vmatpush.bf16.msra.mxu0 0
        %508 = vmatpush.bf16.msra.mxu0 0
        %509 = vmatpush.bf16.msra.mxu0 0
        %510 = vmatpush.bf16.msra.mxu0 0
        %511 = vmatpush.bf16.msra.mxu0 0
        %512 = vmatpush.bf16.msra.mxu0 %v503
        %513 = vmatmul.bf16.gmra.mxu0 %v500
        %v514 = vpop.f32.mrf.mxu0
        %v515 = vadd.f32 0.0, %v514
        %v516 = vpop.f32.mrf.mxu0
        %517 = vdwg.mxu0
        %518 = vrot.lane.b32.xlu0 %v378, 64
        %v519 = vpop.permute.xlu0 %518
        %v521 = vsel %vm308, %v453, 0
        %v524 = vsel %vm459, %v519, 0
        %526 = vmatpush.bf16.msra.mxu0 0
        %527 = vmatpush.bf16.msra.mxu0 0
        %528 = vmatpush.bf16.msra.mxu0 0
        %529 = vmatpush.bf16.msra.mxu0 0
        %530 = vmatpush.bf16.msra.mxu0 0
        %531 = vmatpush.bf16.msra.mxu0 0
        %532 = vmatpush.bf16.msra.mxu0 0
        %533 = vmatpush.bf16.msra.mxu0 %v524
        %534 = vmatmul.bf16.gmra.mxu0 %v521
        %v535 = vpop.f32.mrf.mxu0
        %v536 = vadd.f32 0.0, %v535
        %v537 = vpop.f32.mrf.mxu0
        %538 = vdwg.mxu0
        %540 = vrot.lane.b32.xlu0 %v494, 8
        %v541 = vpop.permute.xlu0 %540
        %544 = vrot.lane.b32.xlu0 %v515, 16
        %v545 = vpop.permute.xlu0 %544
        %548 = vrot.lane.b32.xlu0 %v536, 24
        %v549 = vpop.permute.xlu0 %548
        %v551 = vsel %vm308, %v473, %v541
        %vm552 = vcmask 130048
        %v553 = vsel %vm552, %v551, %v545
        %vm554 = vcmask 195584
        %v555 = vsel %vm554, %v553, %v549
        %v556 = vpack.c.bf16 %v555, %v555
        %v557 = vld [vmem:[#allocation7] sm:$0xf]
        %v558 = vld [vmem:[#allocation7 + $0x4] sm:$0xf]
        %v559 = vld [vmem:[#allocation7 + $0x8] sm:$0xf]
        %v560 = vld [vmem:[#allocation7 + $0xc] sm:$0xf]
        %v561 = vld [vmem:[%s3] sm:$0x1]
        %v563 = vperm.slane %v561, 0
        %v569 = vunpack.c.l.b16 %v557
        %v570 = vunpack.c.l.b16 %v558
        %v571 = vunpack.c.l.b16 %v559
        %v572 = vunpack.c.l.b16 %v560
        %v573 = vpack.c.b16 %v570, %v569
        %v574 = vpack.c.b16 %v572, %v571
        %v578 = vsel %vm267, %v556, 0
        %580 = vmatpush.bf16.msra.mxu0 0
        %581 = vmatpush.bf16.msra.mxu0 0
        %582 = vmatpush.bf16.msra.mxu0 0
        %583 = vmatpush.bf16.msra.mxu0 0
        %584 = vmatpush.bf16.msra.mxu0 0
        %585 = vmatpush.bf16.msra.mxu0 0
        %586 = vmatpush.bf16.msra.mxu0 %v574
        %587 = vmatpush.bf16.msra.mxu0 %v573
        %588 = vmatmul.bf16.gmra.mxu0 %v578
        %v589 = vpop.f32.mrf.mxu0
        %v590 = vadd.f32 %v563, %v589
        %v591 = vpop.f32.mrf.mxu0
        %592 = vdwg.mxu0
        %593 = vst.msk [vmem:[%s247] sm:$0xff] %vm267, %v590
        %s594 = sand.u32 %s119, 1
        %s595 = scalar_lea.sflag [#allocation4], %s594
        %s596 = sand.u32 %s119, 1
        %s597 = smul.addr %s596, 8
        %s598 = scalar_lea.vmem [#allocation8], %s597
        // Predicated region
        $region49: #{tpu_custom_call.1} parent=35 // pred_check
          %p599 = pneg %p129
        $region50: #{tpu_custom_call.1} parent=35 // pred_check_branch
          %601 = sbr.rel (%p599) target = $region52
        $region51: #{tpu_custom_call.1} parent=35 // pred_region
          %603 = vsyncadd %s595, 0
          %s604 = smul.addr %s22, 8
          %s605 = scalar_lea.hbm %s4, %s604
          %s607 = sshll.u32 %s598, 4
          %s608 = int_to_ptr.vmem [resolvable:$true] %s607
          %s609 = sshll.u32 %s605, 4
          %s610 = int_to_ptr.hbm [resolvable:$true] %s609
          %612 = dma.vmem_to_hbm [thread:$0]  %s608, 128, %s610, %s595
        $region52: #{tpu_custom_call.1} parent=35 // pred_fallthru
          _
      $region36: #{tpu_custom_call.1} parent=5 // pred_fallthru
        _
      %p613 = scmp.le.s32.totalorder 2, %s17
      // Predicated region
      $region53: #{tpu_custom_call.1} parent=5 // pred_check
        %p614 = pneg %p613
      $region54: #{tpu_custom_call.1} parent=5 // pred_check_branch
        %616 = sbr.rel (%p614) target = $region56
      $region55: #{tpu_custom_call.1} parent=5 // pred_region
        %s617 = ssub.s32 %s17, 2
        // Predicated region
        $region57: #{tpu_custom_call.1} parent=55 // pred_check
          %p618 = pneg %p135
        $region58: #{tpu_custom_call.1} parent=55 // pred_check_branch
          %620 = sbr.rel (%p618) target = $region60
        $region59: #{tpu_custom_call.1} parent=55 // pred_region
          %s621 = sand.u32 %s120, 1
          %s622 = scalar_lea.sflag [#allocation4], %s621
          %s623 = sand.u32 %s120, 1
          %s624 = smul.addr %s623, 8
          %s625 = scalar_lea.vmem [#allocation8], %s624
          %627 = dma.done %s622, 128
        $region60: #{tpu_custom_call.1} parent=55 // pred_fallthru
          _
      $region56: #{tpu_custom_call.1} parent=5 // pred_fallthru
        _
    $region6: #{tpu_custom_call.1} parent=1 // loop_footer
      %s21 = sadd.s32 1, %s17
    $region7: #{tpu_custom_call.1} parent=1 // loop_footer_branch
      %16 = sbr.rel target = $region3
    $region8: #{tpu_custom_call.1} parent=1 // loop_exit
      _
    %628 = vsyncpa [#allocation3], 1
    %s629 = scalar_lea.sflag [#allocation3], 1
    %630 = vsyncpa %s629, 1
    %631 = vsyncpa [#allocation6], 1
    %632 = vsyncpa [#allocation4], 1
    %s633 = scalar_lea.sflag [#allocation4], 1
    %634 = vsyncpa %s633, 1

</llo_original>
